<compile_context>
chip_gen: v6e
topology: v6e:2x2x1
jax: 0.10.0
libtpu: 0.0.40
codegen_flags: <defaults>
</compile_context>

<pallas_src>
import jax
import jax.numpy as jnp
from jax import lax
from jax.experimental import pallas as pl
from jax.experimental.pallas import tpu as pltpu


def _self_attention_kernel(x_ref, w_ref, b_ref, gamma_ref, o_ref,
                           q_scr, k_scr, v_scr):
    """One (batch, query-tile) grid step.

    x_ref   : (1, C, N)      f32  input tokens (resident for the whole batch elem)
    w_ref   : (2*Cq + C, C)  bf16 fused query|key|value 1x1-conv weights (out, in)
    b_ref   : (2*Cq + C, 1)  f32  fused biases
    gamma   : (1,)           f32  scalar (SMEM)
    o_ref   : (1, C, TQ)     f32  output tile
    q_scr   : (N, Cq)        bf16 scratch - all query projections (token-major)
    k_scr   : (N, Cq)        bf16 scratch - all key projections   (token-major)
    v_scr   : (C, N)         bf16 scratch - all value projections
    """
    qi = pl.program_id(1)
    tq = o_ref.shape[2]
    cq = q_scr.shape[1]

    # ---- fused projections: once per batch element (first query tile) -------
    @pl.when(qi == 0)
    def _project():
        xb = x_ref[0].astype(jnp.bfloat16)                                # (C, N)
        qkv = jnp.dot(w_ref[...], xb,
                      preferred_element_type=jnp.float32) + b_ref[...]    # (2Cq+C, N)
        # Q|K slab -> token-major. (2Cq, N) f32 is (8,128)-tile aligned, so this
        # is one cheap XLU transpose per batch element; every per-tile dot below
        # is then a standard (NN / NT) matmul.
        qk_t = qkv[:2 * cq, :].T                                          # (N, 2Cq)
        q_scr[...] = qk_t[:, :cq].astype(jnp.bfloat16)
        k_scr[...] = qk_t[:, cq:].astype(jnp.bfloat16)
        v_scr[...] = qkv[2 * cq:, :].astype(jnp.bfloat16)                 # (C, N)

    # ---- attention for this query tile --------------------------------------
    col = pl.multiple_of(qi * tq, tq)
    q_t = q_scr[pl.ds(col, tq), :]                                        # (TQ, Cq)

    # scores[i, j] = <q_i, k_j>  (NT dot, flash-attention style)
    scores = lax.dot_general(q_t, k_scr[...], (((1,), (1,)), ((), ())),
                             preferred_element_type=jnp.float32)          # (TQ, N)

    # softmax over keys (f32 math, EUP reciprocal).
    m = jnp.max(scores, axis=-1, keepdims=True)
    e = jnp.exp(scores - m)
    denom = jnp.sum(e, axis=-1, keepdims=True)
    w = e * pl.reciprocal(denom, approx=True)                             # (TQ, N)

    # attended[c, i] = sum_j v[c, j] * w[i, j]  (NT dot).
    att = lax.dot_general(v_scr[...], w.astype(jnp.bfloat16),
                          (((1,), (1,)), ((), ())),
                          preferred_element_type=jnp.float32)             # (C, TQ)

    gamma = gamma_ref[0]
    x_t = x_ref[0, :, pl.ds(col, tq)]                                     # (C, TQ) f32
    o_ref[0] = (gamma * att + x_t).astype(o_ref.dtype)


def self_attention_pallas(x_nchw, wq, bq, wk, bk, wv, bv, gamma, *, tq=128):
    """Pallas forward matching the PyTorch SelfAttention.forward.

    x_nchw: (B, C, H, W) float32
    wq, wk: (C//8, C) -- 1x1-conv weights in conv-native (out_ch, in_ch) form
    wv    : (C, C)
    bq, bk: (C//8,), bv: (C,), gamma: scalar
    """
    B, C, H, W = x_nchw.shape
    N = H * W
    Cq = wq.shape[0]

    # Query-tile size: lane-dense multiple of 128 that divides N, else full N.
    if tq % 128 != 0 or N % tq != 0:
        tq = N
    nq = N // tq

    # NCHW -> (B, C, N): a pure reshape, no HBM transpose round-trip.
    x_bcn = x_nchw.reshape(B, C, N).astype(jnp.float32)

    # Fuse Q, K, V projections into one weight / bias.
    co = 2 * Cq + C
    w_all = jnp.concatenate([wq, wk, wv], axis=0).astype(jnp.bfloat16)    # (2Cq+C, C)
    b_all = jnp.concatenate([bq, bk, bv], axis=0).reshape(co, 1).astype(jnp.float32)
    gamma1 = jnp.asarray(gamma, jnp.float32).reshape(1)

    flops = 2 * B * N * (co * C + N * Cq + N * C)
    bytes_accessed = (2 * B * C * N) * 4 + co * C * 2 + (co + 1) * 4

    out_bcn = pl.pallas_call(
        _self_attention_kernel,
        out_shape=jax.ShapeDtypeStruct((B, C, N), jnp.float32),
        grid_spec=pltpu.PrefetchScalarGridSpec(
            num_scalar_prefetch=0,
            grid=(B, nq),
            in_specs=[
                pl.BlockSpec((1, C, N), lambda b, qi: (b, 0, 0)),         # x (resident per batch)
                pl.BlockSpec((co, C), lambda b, qi: (0, 0)),              # fused wq|wk|wv
                pl.BlockSpec((co, 1), lambda b, qi: (0, 0)),              # fused biases
                pl.BlockSpec(memory_space=pltpu.MemorySpace.SMEM),        # gamma scalar
            ],
            out_specs=pl.BlockSpec((1, C, tq), lambda b, qi: (b, 0, qi)),
            scratch_shapes=[
                pltpu.VMEM((N, Cq), jnp.bfloat16),                        # q (token-major)
                pltpu.VMEM((N, Cq), jnp.bfloat16),                        # k (token-major)
                pltpu.VMEM((C, N), jnp.bfloat16),                         # v
            ],
        ),
        compiler_params=pltpu.CompilerParams(
            dimension_semantics=("parallel", "arbitrary"),
            vmem_limit_bytes=64 * 1024 * 1024,
        ),
        cost_estimate=pl.CostEstimate(
            flops=flops,
            transcendentals=B * N * N,
            bytes_accessed=bytes_accessed,
        ),
    )(x_bcn, w_all, b_all, gamma1)

    # (B, C, N) -> NCHW: pure reshape.
    return out_bcn.reshape(B, C, H, W)


def self_attention_ref(x_nchw, wq, bq, wk, bk, wv, bv, gamma):
    """Plain-JAX reference following the PyTorch code line by line."""
    B, C, H, W = x_nchw.shape
    N = H * W
    xf = x_nchw.reshape(B, C, N)
    # 1x1 conv: out[b, o, n] = sum_c W[o, c] * x[b, c, n] + bias[o]
    q = jnp.einsum("oc,bcn->bon", wq, xf) + bq[None, :, None]             # (B, Cq, N)
    k = jnp.einsum("oc,bcn->bon", wk, xf) + bk[None, :, None]             # (B, Cq, N)
    v = jnp.einsum("oc,bcn->bon", wv, xf) + bv[None, :, None]             # (B, C, N)
    queries = jnp.transpose(q, (0, 2, 1))                                 # (B, N, Cq)
    scores = jnp.einsum("bnd,bdm->bnm", queries, k)                       # (B, N, N)
    weights = jax.nn.softmax(scores, axis=-1)
    attended = jnp.einsum("bcn,bmn->bcm", v, weights)                     # (B, C, N)
    return gamma * attended.reshape(B, C, H, W) + x_nchw


if __name__ == "__main__":
    # input_dim must be >= 8 so that input_dim // 8 >= 1.
    B, C, H, W = 2, 32, 16, 16
    Cq = C // 8

    key = jax.random.PRNGKey(0)
    k_x, k_wq, k_bq, k_wk, k_bk, k_wv, k_bv = jax.random.split(key, 7)

    x = jax.random.normal(k_x, (B, C, H, W), jnp.float32)
    # Conv2d weights in conv-native (out_ch, in_ch) form (1x1 kernel squeezed).
    wq = 0.1 * jax.random.normal(k_wq, (Cq, C), jnp.float32)
    bq = 0.1 * jax.random.normal(k_bq, (Cq,), jnp.float32)
    wk = 0.1 * jax.random.normal(k_wk, (Cq, C), jnp.float32)
    bk = 0.1 * jax.random.normal(k_bk, (Cq,), jnp.float32)
    wv = 0.1 * jax.random.normal(k_wv, (C, C), jnp.float32)
    bv = 0.1 * jax.random.normal(k_bv, (C,), jnp.float32)
    # PyTorch init is gamma = 0 (identity output); use a nonzero deterministic
    # value so the attention path is actually exercised.
    gamma = jnp.float32(0.5)

    out = self_attention_pallas(x, wq, bq, wk, bk, wv, bv, gamma, tq=128)
    out = jax.block_until_ready(out)

    ref = self_attention_ref(x, wq, bq, wk, bk, wv, bv, gamma)
    assert out.shape == (B, C, H, W)
    err = float(jnp.max(jnp.abs(out - ref)))
    # bf16 MXU operands + approx reciprocal -> loosened tolerance vs pure f32.
    assert err < 5e-2, err

    print("KERNEL_OK")
</pallas_src>

<mosaic_0001>
module attributes {stable_mosaic.version = 11 : i64} {
  func.func @_self_attention_kernel(%arg0: i32, %arg1: i32, %arg2: memref<1x32x256xf32, #tpu.memory_space<vmem>>, %arg3: memref<40x32xbf16, #tpu.memory_space<vmem>>, %arg4: memref<40x1xf32, #tpu.memory_space<vmem>>, %arg5: memref<1xf32, #tpu.memory_space<smem>>, %arg6: memref<1x32x128xf32, #tpu.memory_space<vmem>>, %arg7: memref<256x4xbf16, #tpu.memory_space<vmem>>, %arg8: memref<256x4xbf16, #tpu.memory_space<vmem>>, %arg9: memref<32x256xbf16, #tpu.memory_space<vmem>>) attributes {dimension_semantics = [#tpu.dimension_semantics<parallel>, #tpu.dimension_semantics<arbitrary>], iteration_bounds = array<i64: 2, 2>, scalar_prefetch = 0 : i64, scratch_operands = 3 : i64, tpu.core_type = #tpu.core_type<tc>, window_params = [{transform_indices = @transform_0, window_bounds = array<i64: 1, 32, 256>}, {pipeline_mode = #tpu.pipeline_mode<synchronous>, transform_indices = @transform_1, window_bounds = array<i64: 40, 32>}, {pipeline_mode = #tpu.pipeline_mode<synchronous>, transform_indices = @transform_2, window_bounds = array<i64: 40, 1>}, {transform_indices = @transform_3, window_bounds = array<i64: 1>}, {transform_indices = @transform_4, window_bounds = array<i64: 1, 32, 128>}]} {
    %c0_i32 = arith.constant 0 : i32
    %0 = arith.cmpi eq, %arg1, %c0_i32 : i32
    %1 = arith.extui %0 : i1 to i32
    %c0_i32_0 = arith.constant 0 : i32
    %2 = arith.cmpi ne, %1, %c0_i32_0 : i32
    scf.if %2 {
      %c0_14 = arith.constant 0 : index
      %c0_15 = arith.constant 0 : index
      %c0_16 = arith.constant 0 : index
      %32 = vector.load %arg2[%c0_14, %c0_15, %c0_16] : memref<1x32x256xf32, #tpu.memory_space<vmem>>, vector<1x32x256xf32>
      %33 = vector.shape_cast %32 : vector<1x32x256xf32> to vector<32x256xf32>
      %34 = arith.truncf %33 : vector<32x256xf32> to vector<32x256xbf16>
      %c0_17 = arith.constant 0 : index
      %c0_18 = arith.constant 0 : index
      %35 = vector.load %arg3[%c0_17, %c0_18] : memref<40x32xbf16, #tpu.memory_space<vmem>>, vector<40x32xbf16>
      %cst_19 = arith.constant dense<0.000000e+00> : vector<40x256xf32>
      %36 = tpu.matmul %35, %34, %cst_19 {dimension_numbers = #tpu.dot_dimension_numbers<[1], [0], [0], [1], [0, 0, 1, 1], [], []>} : vector<40x32xbf16>, vector<32x256xbf16>, vector<40x256xf32> -> vector<40x256xf32>
      %c0_20 = arith.constant 0 : index
      %c0_21 = arith.constant 0 : index
      %37 = vector.load %arg4[%c0_20, %c0_21] : memref<40x1xf32, #tpu.memory_space<vmem>>, vector<40x1xf32>
      %38 = vector.broadcast %37 : vector<40x1xf32> to vector<40x256xf32>
      %39 = arith.addf %36, %38 : vector<40x256xf32>
      %40 = vector.extract_strided_slice %39 {offsets = [0, 0], sizes = [8, 256], strides = [1, 1]} : vector<40x256xf32> to vector<8x256xf32>
      %41 = tpu.transpose %40, [1, 0] : vector<8x256xf32> -> vector<256x8xf32>
      %42 = vector.extract_strided_slice %41 {offsets = [0, 0], sizes = [256, 4], strides = [1, 1]} : vector<256x8xf32> to vector<256x4xf32>
      %43 = arith.truncf %42 : vector<256x4xf32> to vector<256x4xbf16>
      %c0_22 = arith.constant 0 : index
      %c0_23 = arith.constant 0 : index
      %44 = vector.load %arg7[%c0_22, %c0_23] : memref<256x4xbf16, #tpu.memory_space<vmem>>, vector<256x4xbf16>
      tpu.vector_store %arg7[%c0_22, %c0_23], %43 {strides = array<i32>} : memref<256x4xbf16, #tpu.memory_space<vmem>>, vector<256x4xbf16>,
      %45 = vector.extract_strided_slice %41 {offsets = [0, 4], sizes = [256, 4], strides = [1, 1]} : vector<256x8xf32> to vector<256x4xf32>
      %46 = arith.truncf %45 : vector<256x4xf32> to vector<256x4xbf16>
      %c0_24 = arith.constant 0 : index
      %c0_25 = arith.constant 0 : index
      %47 = vector.load %arg8[%c0_24, %c0_25] : memref<256x4xbf16, #tpu.memory_space<vmem>>, vector<256x4xbf16>
      tpu.vector_store %arg8[%c0_24, %c0_25], %46 {strides = array<i32>} : memref<256x4xbf16, #tpu.memory_space<vmem>>, vector<256x4xbf16>,
      %48 = vector.extract_strided_slice %39 {offsets = [8, 0], sizes = [32, 256], strides = [1, 1]} : vector<40x256xf32> to vector<32x256xf32>
      %49 = arith.truncf %48 : vector<32x256xf32> to vector<32x256xbf16>
      %c0_26 = arith.constant 0 : index
      %c0_27 = arith.constant 0 : index
      %50 = vector.load %arg9[%c0_26, %c0_27] : memref<32x256xbf16, #tpu.memory_space<vmem>>, vector<32x256xbf16>
      tpu.vector_store %arg9[%c0_26, %c0_27], %49 {strides = array<i32>} : memref<32x256xbf16, #tpu.memory_space<vmem>>, vector<32x256xbf16>,
    } else {
    }
    %c128_i32 = arith.constant 128 : i32
    %3 = arith.muli %arg1, %c128_i32 : i32
    %4 = tpu.assume_multiple %3, 128 : i32
    %5 = arith.index_cast %4 : i32 to index
    %c0 = arith.constant 0 : index
    %6 = vector.load %arg7[%5, %c0] : memref<256x4xbf16, #tpu.memory_space<vmem>>, vector<128x4xbf16>
    %c0_1 = arith.constant 0 : index
    %c0_2 = arith.constant 0 : index
    %7 = vector.load %arg8[%c0_1, %c0_2] : memref<256x4xbf16, #tpu.memory_space<vmem>>, vector<256x4xbf16>
    %cst = arith.constant dense<0.000000e+00> : vector<128x256xf32>
    %8 = tpu.matmul %6, %7, %cst {dimension_numbers = #tpu.dot_dimension_numbers<[1], [1], [0], [0], [0, 0, 1, 0], [], []>} : vector<128x4xbf16>, vector<256x4xbf16>, vector<128x256xf32> -> vector<128x256xf32>
    %cst_3 = arith.constant dense<0xFF800000> : vector<128xf32>
    %9 = vector.multi_reduction <maximumf>, %8, %cst_3 [1] : vector<128x256xf32> to vector<128xf32>
    %10 = vector.shape_cast %9 : vector<128xf32> to vector<128x1xf32>
    %11 = vector.broadcast %10 : vector<128x1xf32> to vector<128x256xf32>
    %12 = arith.subf %8, %11 : vector<128x256xf32>
    %13 = math.exp %12 : vector<128x256xf32>
    %cst_4 = arith.constant dense<0.000000e+00> : vector<128xf32>
    %14 = vector.multi_reduction <add>, %13, %cst_4 [1] : vector<128x256xf32> to vector<128xf32>
    %15 = vector.shape_cast %14 : vector<128xf32> to vector<128x1xf32>
    %16 = tpu.reciprocal %15 {approx = true} : vector<128x1xf32> -> vector<128x1xf32>
    %17 = vector.broadcast %16 : vector<128x1xf32> to vector<128x256xf32>
    %18 = arith.mulf %13, %17 : vector<128x256xf32>
    %c0_5 = arith.constant 0 : index
    %c0_6 = arith.constant 0 : index
    %19 = vector.load %arg9[%c0_5, %c0_6] : memref<32x256xbf16, #tpu.memory_space<vmem>>, vector<32x256xbf16>
    %20 = arith.truncf %18 : vector<128x256xf32> to vector<128x256xbf16>
    %cst_7 = arith.constant dense<0.000000e+00> : vector<32x128xf32>
    %21 = tpu.matmul %19, %20, %cst_7 {dimension_numbers = #tpu.dot_dimension_numbers<[1], [1], [0], [0], [0, 0, 1, 0], [], []>} : vector<32x256xbf16>, vector<128x256xbf16>, vector<32x128xf32> -> vector<32x128xf32>
    %c0_8 = arith.constant 0 : index
    %22 = memref.load %arg5[%c0_8] : memref<1xf32, #tpu.memory_space<smem>>
    %c0_9 = arith.constant 0 : index
    %c0_10 = arith.constant 0 : index
    %23 = arith.index_cast %4 : i32 to index
    %24 = vector.load %arg2[%c0_9, %c0_10, %23] : memref<1x32x256xf32, #tpu.memory_space<vmem>>, vector<1x32x128xf32>
    %25 = vector.shape_cast %24 : vector<1x32x128xf32> to vector<32x128xf32>
    %26 = vector.broadcast %22 : f32 to vector<32x128xf32>
    %27 = arith.mulf %26, %21 : vector<32x128xf32>
    %28 = arith.addf %27, %25 : vector<32x128xf32>
    %c0_11 = arith.constant 0 : index
    %c0_12 = arith.constant 0 : index
    %c0_13 = arith.constant 0 : index
    %29 = vector.load %arg6[%c0_11, %c0_12, %c0_13] : memref<1x32x128xf32, #tpu.memory_space<vmem>>, vector<1x32x128xf32>
    %30 = vector.shape_cast %29 : vector<1x32x128xf32> to vector<32x128xf32>
    %31 = vector.shape_cast %28 : vector<32x128xf32> to vector<1x32x128xf32>
    tpu.vector_store %arg6[%c0_11, %c0_12, %c0_13], %31 {strides = array<i32>} : memref<1x32x128xf32, #tpu.memory_space<vmem>>, vector<1x32x128xf32>,
    return
  }
  func.func @transform_0(%arg0: i32, %arg1: i32) -> (i32, i32, i32) {
    %c0_i32 = arith.constant 0 : i32
    %c0_i32_0 = arith.constant 0 : i32
    %c0_i32_1 = arith.constant 0 : i32
    return %arg0, %c0_i32, %c0_i32_0 : i32, i32, i32
  }
  func.func @transform_1(%arg0: i32, %arg1: i32) -> (i32, i32) {
    %c0_i32 = arith.constant 0 : i32
    %c0_i32_0 = arith.constant 0 : i32
    %c0_i32_1 = arith.constant 0 : i32
    return %c0_i32, %c0_i32_0 : i32, i32
  }
  func.func @transform_2(%arg0: i32, %arg1: i32) -> (i32, i32) {
    %c0_i32 = arith.constant 0 : i32
    %c0_i32_0 = arith.constant 0 : i32
    %c0_i32_1 = arith.constant 0 : i32
    return %c0_i32, %c0_i32_0 : i32, i32
  }
  func.func @transform_3(%arg0: i32, %arg1: i32) -> i32 {
    %c0_i32 = arith.constant 0 : i32
    %c0_i32_0 = arith.constant 0 : i32
    return %c0_i32 : i32
  }
  func.func @transform_4(%arg0: i32, %arg1: i32) -> (i32, i32, i32) {
    %c0_i32 = arith.constant 0 : i32
    %c0_i32_0 = arith.constant 0 : i32
    return %arg0, %c0_i32, %arg1 : i32, i32, i32
  }
}

</mosaic_0001>

<llo_original>
// kernel: tpu_custom_call.1
$region0: #{tpu_custom_call.1}
  #allocation0 [shape = 'u32[]', space=smem, size = 0x4, offset = 0x4, fixed_abs, tag = 'smem constant byte address 0x4 - core index']
  #allocation1 [shape = 'u32[144,128]{1,0:T(1,128)}', space=vmem, size = 0x12000, scoped, tag = 'internal scratch']
  #allocation2 [shape = 'bf16[256,4]{1,0:T(8,128)(2,1)}', space=vmem, size = 0x10000, scoped, tag = 'scratch operand']
  #allocation3 [shape = 'bf16[256,4]{1,0:T(8,128)(2,1)}', space=vmem, size = 0x10000, scoped, tag = 'scratch operand']
  #allocation4 [shape = 'bf16[32,256]{1,0:T(8,128)(2,1)}', space=vmem, size = 0x4000, scoped, tag = 'scratch operand']
  #allocation5 [shape = 'f32[1]{0:T(128)S(6)}', space=smem, size = 0x200, scoped, tag = 'scoped memory for tpu_custom_call.1']
  %s0 = inlined_call_operand.hbm [shape: f32[2,32,256], index: 0, kind: input, shape index: {}]
  %s1 = inlined_call_operand.vmem [shape: bf16[40,32], index: 1, kind: input, shape index: {}]
  %s2 = inlined_call_operand.vmem [shape: f32[40,1], index: 2, kind: input, shape index: {}]
  %s3 = inlined_call_operand.<no memory space> [shape: f32[1], index: 3, kind: input, shape index: {}]
  %s4 = inlined_call_operand.hbm [shape: f32[2,32,256], index: 4, kind: output, shape index: {}]
  %s5 = sld [smem:[#allocation0]]
  $region57: #{tpu_custom_call.1} parent=0
    _
  %s7 = ssub.s32 1, %s5
  %s8 = scalar_select 0, %s7, %s5
  %9 = sst [smem:[#allocation5]] %s3
  $region1: #{tpu_custom_call.1} parent=0
    #allocation6 [shape = 'u8[65536]{0}', space=vmem, size = 0x10000, scoped, tag = 'input window, operand 0']
    #allocation7 [shape = 's32[2]{0}', space=sflag, size = 0x8, scoped, tag = 'scoped memory for tpu_custom_call.1']
    #allocation8 [shape = 's32[2]{0}', space=sflag, size = 0x8, scoped, tag = 'scoped memory for tpu_custom_call.1']
    #allocation9 [shape = 'u8[32768]{0}', space=vmem, size = 0x8000, scoped, tag = 'output window, operand 0']
    %10 = vsyncpa [#allocation7], 0
    %s11 = scalar_lea.sflag [#allocation7], 1
    %12 = vsyncpa %s11, 0
    %13 = vsyncpa [#allocation8], 0
    %s14 = scalar_lea.sflag [#allocation8], 1
    %15 = vsyncpa %s14, 0
    loop: start=0, step=1, limit=6
    $region2: #{tpu_custom_call.1} parent=1 // loop_pre_header
      _
    $region3: #{tpu_custom_call.1} parent=1 // loop_header
      %s17 = sphi 0, %s21
      %p18 = scmp.ge.s32.totalorder %s17, 6
      %s24 = sphi 0, %s36
      %s25 = sphi 0, %s32
      %s26 = sphi 0, %s24
      %s27 = sphi 0, %s25
      %s28 = sphi 0, %s26
      %s29 = sphi 0, %s27
      %s39 = sphi 0, %s41
      %s42 = sphi 0, %s39
      %s43 = sphi 0, %s42
      %s59 = sphi 0, %s43
      %s63 = sphi 0, %s63
      %s65 = sphi 0, %s63
      %s66 = sphi 0, %s65
      %s80 = sphi 0, %s66
      %s84 = sphi 0, %s84
      %s86 = sphi 0, %s84
      %s87 = sphi 0, %s86
      %s101 = sphi 0, %s87
      %s105 = sphi 0, %s105
      %s107 = sphi 0, %s105
      %s108 = sphi 0, %s107
      %s122 = sphi 0, %s108
      %s130 = sphi 0, %s132
      %s133 = sphi 0, %s130
      %s134 = sphi 0, %s133
      %s150 = sphi 0, %s134
    $region4: #{tpu_custom_call.1} parent=1 // loop_header_branch
      %20 = sbr.rel (%p18) target = $region8
    $region5: #{tpu_custom_call.1} parent=1 // loop_body
      %s22 = ssub.s32 %s17, 1
      %s23 = ssub.s32 %s17, 2
      %s30 = sadd.s32 1, %s25
      %p31 = scmp.ge.s32.totalorder %s30, 2
      %s32 = scalar_select %p31, 0, %s30
      %s33 = sadd.s32 1, %s24
      %s34 = scalar_select %p31, %s33, %s24
      %p35 = scmp.ge.s32.totalorder %s34, 2
      %s36 = scalar_select %p35, 0, %s34
      %s37 = ssub.s32 %s24, %s36
      %p38 = scmp.eq.s32.totalorder %s37, 0
      %s40 = sadd.s32 %s39, 1
      %s41 = scalar_select %p38, %s39, %s40
      %p44 = pneg %p38
      %p45 = scmp.eq.s32.totalorder %s17, 3
      %p46 = por %p44, %p45
      %p47 = scmp.ne.s32.totalorder %s39, %s42
      %p48 = scmp.eq.s32.totalorder %s17, 0
      %p49 = por %p47, %p48
      %p50 = scmp.ne.s32.totalorder %s39, %s42
      %p51 = scmp.eq.s32.totalorder %s22, 3
      %p52 = por %p50, %p51
      %p53 = scmp.ne.s32.totalorder %s42, %s43
      %p54 = scmp.eq.s32.totalorder %s22, 0
      %p55 = por %p53, %p54
      %p56 = scmp.ne.s32.totalorder %s42, %s43
      %p57 = scmp.eq.s32.totalorder %s23, 3
      %p58 = por %p56, %p57
      %p60 = scmp.ne.s32.totalorder %s43, %s59
      %p61 = scmp.eq.s32.totalorder %s23, 0
      %p62 = por %p60, %p61
      %s64 = sadd.s32 %s63, 1
      %p67 = scmp.eq.s32.totalorder %s17, 3
      %p68 = scmp.ne.s32.totalorder %s63, %s65
      %p69 = scmp.eq.s32.totalorder %s17, 0
      %p70 = por %p68, %p69
      %p71 = scmp.ne.s32.totalorder %s63, %s65
      %p72 = scmp.eq.s32.totalorder %s22, 3
      %p73 = por %p71, %p72
      %p74 = scmp.ne.s32.totalorder %s65, %s66
      %p75 = scmp.eq.s32.totalorder %s22, 0
      %p76 = por %p74, %p75
      %p77 = scmp.ne.s32.totalorder %s65, %s66
      %p78 = scmp.eq.s32.totalorder %s23, 3
      %p79 = por %p77, %p78
      %p81 = scmp.ne.s32.totalorder %s66, %s80
      %p82 = scmp.eq.s32.totalorder %s23, 0
      %p83 = por %p81, %p82
      %s85 = sadd.s32 %s84, 1
      %p88 = scmp.eq.s32.totalorder %s17, 3
      %p89 = scmp.ne.s32.totalorder %s84, %s86
      %p90 = scmp.eq.s32.totalorder %s17, 0
      %p91 = por %p89, %p90
      %p92 = scmp.ne.s32.totalorder %s84, %s86
      %p93 = scmp.eq.s32.totalorder %s22, 3
      %p94 = por %p92, %p93
      %p95 = scmp.ne.s32.totalorder %s86, %s87
      %p96 = scmp.eq.s32.totalorder %s22, 0
      %p97 = por %p95, %p96
      %p98 = scmp.ne.s32.totalorder %s86, %s87
      %p99 = scmp.eq.s32.totalorder %s23, 3
      %p100 = por %p98, %p99
      %p102 = scmp.ne.s32.totalorder %s87, %s101
      %p103 = scmp.eq.s32.totalorder %s23, 0
      %p104 = por %p102, %p103
      %s106 = sadd.s32 %s105, 1
      %p109 = scmp.eq.s32.totalorder %s17, 3
      %p110 = scmp.ne.s32.totalorder %s105, %s107
      %p111 = scmp.eq.s32.totalorder %s17, 0
      %p112 = por %p110, %p111
      %p113 = scmp.ne.s32.totalorder %s105, %s107
      %p114 = scmp.eq.s32.totalorder %s22, 3
      %p115 = por %p113, %p114
      %p116 = scmp.ne.s32.totalorder %s107, %s108
      %p117 = scmp.eq.s32.totalorder %s22, 0
      %p118 = por %p116, %p117
      %p119 = scmp.ne.s32.totalorder %s107, %s108
      %p120 = scmp.eq.s32.totalorder %s23, 3
      %p121 = por %p119, %p120
      %p123 = scmp.ne.s32.totalorder %s108, %s122
      %p124 = scmp.eq.s32.totalorder %s23, 0
      %p125 = por %p123, %p124
      %s126 = ssub.s32 %s24, %s36
      %s127 = ssub.s32 %s25, %s32
      %s128 = sor.u32 %s126, %s127
      %p129 = scmp.eq.s32.totalorder %s128, 0
      %s131 = sadd.s32 %s130, 1
      %s132 = scalar_select %p129, %s130, %s131
      %p135 = pneg %p129
      %p136 = scmp.eq.s32.totalorder %s17, 3
      %p137 = por %p135, %p136
      %p138 = scmp.ne.s32.totalorder %s130, %s133
      %p139 = scmp.eq.s32.totalorder %s17, 0
      %p140 = por %p138, %p139
      %p141 = scmp.ne.s32.totalorder %s130, %s133
      %p142 = scmp.eq.s32.totalorder %s22, 3
      %p143 = por %p141, %p142
      %p144 = scmp.ne.s32.totalorder %s133, %s134
      %p145 = scmp.eq.s32.totalorder %s22, 0
      %p146 = por %p144, %p145
      %p147 = scmp.ne.s32.totalorder %s133, %s134
      %p148 = scmp.eq.s32.totalorder %s23, 3
      %p149 = por %p147, %p148
      %p151 = scmp.ne.s32.totalorder %s134, %s150
      %p152 = scmp.eq.s32.totalorder %s23, 0
      %p153 = por %p151, %p152
      %p154 = scmp.le.s32.totalorder 1, %s17
      %p155 = scmp.lt.s32.totalorder %s17, 5
      %p156 = pnand %p154, %p155
      %p157 = pneg %p156
      // Predicated region
      $region9: #{tpu_custom_call.1} parent=5 // pred_check
        _
      $region10: #{tpu_custom_call.1} parent=5 // pred_check_branch
        %159 = sbr.rel (%p156) target = $region12
      $region11: #{tpu_custom_call.1} parent=5 // pred_region
        %s160 = ssub.s32 %s17, 1
        // Predicated region
        $region13: #{tpu_custom_call.1} parent=11 // pred_check
          %p161 = pneg %p76
        $region14: #{tpu_custom_call.1} parent=11 // pred_check_branch
          %163 = sbr.rel (%p161) target = $region16
        $region15: #{tpu_custom_call.1} parent=11 // pred_region
          _
        $region16: #{tpu_custom_call.1} parent=11 // pred_fallthru
          _
        // Predicated region
        $region17: #{tpu_custom_call.1} parent=11 // pred_check
          %p164 = pneg %p97
        $region18: #{tpu_custom_call.1} parent=11 // pred_check_branch
          %166 = sbr.rel (%p164) target = $region20
        $region19: #{tpu_custom_call.1} parent=11 // pred_region
          _
        $region20: #{tpu_custom_call.1} parent=11 // pred_fallthru
          _
        // Predicated region
        $region21: #{tpu_custom_call.1} parent=11 // pred_check
          %p167 = pneg %p118
        $region22: #{tpu_custom_call.1} parent=11 // pred_check_branch
          %169 = sbr.rel (%p167) target = $region24
        $region23: #{tpu_custom_call.1} parent=11 // pred_region
          _
        $region24: #{tpu_custom_call.1} parent=11 // pred_fallthru
          _
      $region12: #{tpu_custom_call.1} parent=5 // pred_fallthru
        _
      %p170 = scmp.lt.s32.totalorder %s17, 4
      // Predicated region
      $region25: #{tpu_custom_call.1} parent=5 // pred_check
        %p171 = pneg %p170
      $region26: #{tpu_custom_call.1} parent=5 // pred_check_branch
        %173 = sbr.rel (%p171) target = $region28
      $region27: #{tpu_custom_call.1} parent=5 // pred_region
        // Predicated region
        $region29: #{tpu_custom_call.1} parent=27 // pred_check
          %p174 = pneg %p49
        $region30: #{tpu_custom_call.1} parent=27 // pred_check_branch
          %176 = sbr.rel (%p174) target = $region32
        $region31: #{tpu_custom_call.1} parent=27 // pred_region
          %s177 = sand.u32 %s39, 1
          %s178 = scalar_lea.sflag [#allocation7], %s177
          %s179 = sand.u32 %s39, 1
          %s180 = smul.addr %s179, 64
          %s181 = scalar_lea.vmem [#allocation6], %s180
          %s183 = ssub.s32 1024, 1024
          %184 = vsyncadd %s178, %s183
          %s185 = smul.addr %s24, 8
          %s186 = smul.addr %s185, 128
          %s187 = scalar_lea.hbm %s0, %s186
          %s188 = sshll.u32 %s181, 4
          %s189 = int_to_ptr.vmem [resolvable:$true] %s188
          %194 = dma.hbm_to_vmem [thread:$0]  %s187, 1024, %s189, %s178, 256, 256, 16
        $region32: #{tpu_custom_call.1} parent=27 // pred_fallthru
          _
      $region28: #{tpu_custom_call.1} parent=5 // pred_fallthru
        _
      %p195 = scmp.le.s32.totalorder 1, %s17
      %p196 = scmp.lt.s32.totalorder %s17, 5
      %p197 = pnand %p195, %p196
      %p198 = pneg %p197
      // Predicated region
      $region33: #{tpu_custom_call.1} parent=5 // pred_check
        _
      $region34: #{tpu_custom_call.1} parent=5 // pred_check_branch
        %200 = sbr.rel (%p197) target = $region36
      $region35: #{tpu_custom_call.1} parent=5 // pred_region
        %s201 = ssub.s32 %s17, 1
        %s202 = sand.u32 %s42, 1
        %s203 = scalar_lea.sflag [#allocation7], %s202
        %s204 = sand.u32 %s42, 1
        %s205 = smul.addr %s204, 64
        %s206 = scalar_lea.vmem [#allocation6], %s205
        // Predicated region
        $region37: #{tpu_custom_call.1} parent=35 // pred_check
          %p207 = pneg %p55
        $region38: #{tpu_custom_call.1} parent=35 // pred_check_branch
          %209 = sbr.rel (%p207) target = $region40
        $region39: #{tpu_custom_call.1} parent=35 // pred_region
          %210 = dma.done %s203, 1024
        $region40: #{tpu_custom_call.1} parent=35 // pred_fallthru
          _
        %s211 = sand.u32 %s42, 1
        %s212 = scalar_lea.sflag [#allocation7], %s211
        %s213 = sand.u32 %s42, 1
        %s214 = smul.addr %s213, 64
        %s215 = scalar_lea.vmem [#allocation6], %s214
        %p216 = pneg %p55
        %p217 = pneg %p52
        %p218 = pneg %p76
        %p219 = pneg %p73
        %p220 = pneg %p97
        %p221 = pneg %p94
        %p222 = pneg %p118
        %p223 = pneg %p115
        %p224 = pneg %p146
        %p225 = pneg %p143
        %s226 = sand.u32 %s133, 1
        %s227 = scalar_lea.sflag [#allocation8], %s226
        %s228 = sand.u32 %s133, 1
        %s229 = smul.addr %s228, 32
        %s230 = scalar_lea.vmem [#allocation9], %s229
        %p232 = scmp.eq.s32.totalorder %s27, 0
        // Predicated region
        $region41: #{tpu_custom_call.1} parent=35 // pred_check
          %p233 = pneg %p232
        $region42: #{tpu_custom_call.1} parent=35 // pred_check_branch
          %235 = sbr.rel (%p233) target = $region44
        $region43: #{tpu_custom_call.1} parent=35 // pred_region
          %v236 = vld [vmem:[%s206] sm:$0xff]
          %v237 = vld [vmem:[%s206 + $0x8] sm:$0xff]
          %v238 = vld [vmem:[%s206 + $0x10] sm:$0xff]
          %v239 = vld [vmem:[%s206 + $0x18] sm:$0xff]
          %v240 = vld [vmem:[%s206 + $0x20] sm:$0xff]
          %v241 = vld [vmem:[%s206 + $0x28] sm:$0xff]
          %v242 = vld [vmem:[%s206 + $0x30] sm:$0xff]
          %v243 = vld [vmem:[%s206 + $0x38] sm:$0xff]
          %v244 = vpack.c.bf16 %v238, %v236
          %v245 = vpack.c.bf16 %v239, %v237
          %v246 = vpack.c.bf16 %v242, %v240
          %v247 = vpack.c.bf16 %v243, %v241
          %v248 = vld [vmem:[%s1] sm:$0xf]
          %v249 = vld [vmem:[%s1 + $0x4] sm:$0xf]
          %v250 = vld [vmem:[%s1 + $0x8] sm:$0xf]
          %v251 = vld [vmem:[%s1 + $0xc] sm:$0xf]
          %v252 = vld [vmem:[%s1 + $0x10] sm:$0xf]
          %v253 = vld [vmem:[%s2] sm:$0xff]
          %v254 = vld [vmem:[%s2 + $0x8] sm:$0xff]
          %v255 = vld [vmem:[%s2 + $0x10] sm:$0xff]
          %v256 = vld [vmem:[%s2 + $0x18] sm:$0xff]
          %v257 = vld [vmem:[%s2 + $0x20] sm:$0xff]
          %259 = vset.pattern.permute.xlu0 0
          %260 = vperm.xlu0 %259, %v253
          %v261 = vpop.permute.xlu0 %260
          %264 = vset.pattern.permute.xlu0 0
          %265 = vperm.xlu0 %264, %v254
          %v266 = vpop.permute.xlu0 %265
          %269 = vset.pattern.permute.xlu0 0
          %270 = vperm.xlu0 %269, %v255
          %v271 = vpop.permute.xlu0 %270
          %274 = vset.pattern.permute.xlu0 0
          %275 = vperm.xlu0 %274, %v256
          %v276 = vpop.permute.xlu0 %275
          %279 = vset.pattern.permute.xlu0 0
          %280 = vperm.xlu0 %279, %v257
          %v281 = vpop.permute.xlu0 %280
          %v288 = vunpack.c.l.b16 %v248
          %v289 = vunpack.c.l.b16 %v249
          %v290 = vunpack.c.l.b16 %v250
          %v291 = vunpack.c.l.b16 %v251
          %v292 = vunpack.c.l.b16 %v252
          %v293 = vpack.c.b16 %v289, %v288
          %v294 = vpack.c.b16 %v291, %v290
          %v295 = vpack.c.b16 %v292, %v292
          %vm296 = vcmask 261120
          %v298 = vsel %vm296, %v293, 0
          %v301 = vsel %vm296, %v294, 0
          %v304 = vsel %vm296, %v295, 0
          %306 = vmatprep.subr.bf16.mxu0 0
          %307 = vmatpush1.bf16.msra.mxu0 0
          %308 = vmatprep.subr.bf16.mxu0 0
          %309 = vmatpush1.bf16.msra.mxu0 0
          %310 = vmatprep.subr.bf16.mxu0 0
          %311 = vmatpush1.bf16.msra.mxu0 0
          %312 = vmatprep.subr.bf16.mxu0 0
          %313 = vmatpush1.bf16.msra.mxu0 0
          %314 = vmatprep.subr.bf16.mxu0 0
          %315 = vmatpush1.bf16.msra.mxu0 0
          %316 = vmatprep.subr.bf16.mxu0 0
          %317 = vmatpush1.bf16.msra.mxu0 0
          %318 = vmatprep.subr.bf16.mxu0 %v247
          %319 = vmatpush1.bf16.msra.mxu0 %v246
          %320 = vmatprep.subr.bf16.mxu0 %v245
          %321 = vmatpush1.bf16.msra.mxu0 %v244
          %322 = vmatprep.subr.bf16.mxu0 0
          %323 = vmatpush2.bf16.msra.mxu0 0
          %324 = vmatprep.subr.bf16.mxu0 0
          %325 = vmatpush2.bf16.msra.mxu0 0
          %326 = vmatprep.subr.bf16.mxu0 0
          %327 = vmatpush2.bf16.msra.mxu0 0
          %328 = vmatprep.subr.bf16.mxu0 0
          %329 = vmatpush2.bf16.msra.mxu0 0
          %330 = vmatprep.subr.bf16.mxu0 0
          %331 = vmatpush2.bf16.msra.mxu0 0
          %332 = vmatprep.subr.bf16.mxu0 0
          %333 = vmatpush2.bf16.msra.mxu0 0
          %334 = vmatprep.subr.bf16.mxu0 0
          %335 = vmatpush2.bf16.msra.mxu0 0
          %336 = vmatprep.subr.bf16.mxu0 0
          %337 = vmatpush2.bf16.msra.mxu0 0
          %338 = vmatprep.mubr.bf16.mxu0 0
          %339 = vmatmul.mubr.bf16.gmra.mxu0 %v298
          %v340 = vpop.f32.mrf.mxu0
          %v341 = vadd.f32 %v261, %v340
          %v342 = vpop.f32.mrf.mxu0
          %v343 = vadd.f32 %v261, %v342
          %v344 = vpop.f32.mrf.mxu0
          %v345 = vadd.f32 %v266, %v344
          %v346 = vpop.f32.mrf.mxu0
          %v347 = vadd.f32 %v266, %v346
          %348 = vmatprep.mubr.bf16.mxu0 0
          %349 = vmatmul.mubr.bf16.gmra.mxu0 %v301
          %v350 = vpop.f32.mrf.mxu0
          %v351 = vadd.f32 %v271, %v350
          %v352 = vpop.f32.mrf.mxu0
          %v353 = vadd.f32 %v271, %v352
          %v354 = vpop.f32.mrf.mxu0
          %v355 = vadd.f32 %v276, %v354
          %v356 = vpop.f32.mrf.mxu0
          %v357 = vadd.f32 %v276, %v356
          %358 = vmatprep.mubr.bf16.mxu0 0
          %359 = vmatmul.mubr.bf16.gmra.mxu0 %v304
          %v360 = vpop.f32.mrf.mxu0
          %v361 = vadd.f32 %v281, %v360
          %v362 = vpop.f32.mrf.mxu0
          %v363 = vadd.f32 %v281, %v362
          %v364 = vpop.f32.mrf.mxu0
          %v365 = vpop.f32.mrf.mxu0
          %366 = vdwg.mxu0
          %367 = vxpose.xlu0.b32.start [1/16] %v341, 128
          %368 = vxpose.xlu0.b32.cont [2/16] 0.0, 128
          %369 = vxpose.xlu0.b32.cont [3/16] 0.0, 128
          %370 = vxpose.xlu0.b32.cont [4/16] 0.0, 128
          %371 = vxpose.xlu0.b32.cont [5/16] 0.0, 128
          %372 = vxpose.xlu0.b32.cont [6/16] 0.0, 128
          %373 = vxpose.xlu0.b32.cont [7/16] 0.0, 128
          %374 = vxpose.xlu0.b32.cont [8/16] 0.0, 128
          %375 = vxpose.xlu0.b32.cont [9/16] 0.0, 128
          %376 = vxpose.xlu0.b32.cont [10/16] 0.0, 128
          %377 = vxpose.xlu0.b32.cont [11/16] 0.0, 128
          %378 = vxpose.xlu0.b32.cont [12/16] 0.0, 128
          %379 = vxpose.xlu0.b32.cont [13/16] 0.0, 128
          %380 = vxpose.xlu0.b32.cont [14/16] 0.0, 128
          %381 = vxpose.xlu0.b32.cont [15/16] 0.0, 128
          %382 = vxpose.xlu0.b32.end [16/16] 0.0, 128
          %v383 = vpop.trf.xlu0
          %v384 = vpop.trf.xlu0
          %v385 = vpop.trf.xlu0
          %v386 = vpop.trf.xlu0
          %v387 = vpop.trf.xlu0
          %v388 = vpop.trf.xlu0
          %v389 = vpop.trf.xlu0
          %v390 = vpop.trf.xlu0
          %v391 = vpop.trf.xlu0
          %v392 = vpop.trf.xlu0
          %v393 = vpop.trf.xlu0
          %v394 = vpop.trf.xlu0
          %v395 = vpop.trf.xlu0
          %v396 = vpop.trf.xlu0
          %v397 = vpop.trf.xlu0
          %v398 = vpop.trf.xlu0
          %399 = vxpose.xlu0.b32.start [1/16] %v343, 128
          %400 = vxpose.xlu0.b32.cont [2/16] 0.0, 128
          %401 = vxpose.xlu0.b32.cont [3/16] 0.0, 128
          %402 = vxpose.xlu0.b32.cont [4/16] 0.0, 128
          %403 = vxpose.xlu0.b32.cont [5/16] 0.0, 128
          %404 = vxpose.xlu0.b32.cont [6/16] 0.0, 128
          %405 = vxpose.xlu0.b32.cont [7/16] 0.0, 128
          %406 = vxpose.xlu0.b32.cont [8/16] 0.0, 128
          %407 = vxpose.xlu0.b32.cont [9/16] 0.0, 128
          %408 = vxpose.xlu0.b32.cont [10/16] 0.0, 128
          %409 = vxpose.xlu0.b32.cont [11/16] 0.0, 128
          %410 = vxpose.xlu0.b32.cont [12/16] 0.0, 128
          %411 = vxpose.xlu0.b32.cont [13/16] 0.0, 128
          %412 = vxpose.xlu0.b32.cont [14/16] 0.0, 128
          %413 = vxpose.xlu0.b32.cont [15/16] 0.0, 128
          %414 = vxpose.xlu0.b32.end [16/16] 0.0, 128
          %v415 = vpop.trf.xlu0
          %v416 = vpop.trf.xlu0
          %v417 = vpop.trf.xlu0
          %v418 = vpop.trf.xlu0
          %v419 = vpop.trf.xlu0
          %v420 = vpop.trf.xlu0
          %v421 = vpop.trf.xlu0
          %v422 = vpop.trf.xlu0
          %v423 = vpop.trf.xlu0
          %v424 = vpop.trf.xlu0
          %v425 = vpop.trf.xlu0
          %v426 = vpop.trf.xlu0
          %v427 = vpop.trf.xlu0
          %v428 = vpop.trf.xlu0
          %v429 = vpop.trf.xlu0
          %v430 = vpop.trf.xlu0
          %v431 = vpack.c.bf16 %v384, %v383
          %v432 = vpack.c.bf16 %v386, %v385
          %v433 = vpack.c.bf16 %v388, %v387
          %v434 = vpack.c.bf16 %v390, %v389
          %v435 = vpack.c.bf16 %v392, %v391
          %v436 = vpack.c.bf16 %v394, %v393
          %v437 = vpack.c.bf16 %v396, %v395
          %v438 = vpack.c.bf16 %v398, %v397
          %v439 = vpack.c.bf16 %v416, %v415
          %v440 = vpack.c.bf16 %v418, %v417
          %v441 = vpack.c.bf16 %v420, %v419
          %v442 = vpack.c.bf16 %v422, %v421
          %v443 = vpack.c.bf16 %v424, %v423
          %v444 = vpack.c.bf16 %v426, %v425
          %v445 = vpack.c.bf16 %v428, %v427
          %v446 = vpack.c.bf16 %v430, %v429
          %v463 = vunpack.c.l.b16 %v431
          %v464 = vunpack.c.h.b16 %v431
          %v465 = vunpack.c.l.b16 %v432
          %v466 = vunpack.c.h.b16 %v432
          %v467 = vunpack.c.l.b16 %v433
          %v468 = vunpack.c.h.b16 %v433
          %v469 = vunpack.c.l.b16 %v434
          %v470 = vunpack.c.h.b16 %v434
          %v471 = vunpack.c.l.b16 %v435
          %v472 = vunpack.c.h.b16 %v435
          %v473 = vunpack.c.l.b16 %v436
          %v474 = vunpack.c.h.b16 %v436
          %v475 = vunpack.c.l.b16 %v437
          %v476 = vunpack.c.h.b16 %v437
          %v477 = vunpack.c.l.b16 %v438
          %v478 = vunpack.c.h.b16 %v438
          %v479 = vunpack.c.l.b16 %v439
          %v480 = vunpack.c.h.b16 %v439
          %v481 = vunpack.c.l.b16 %v440
          %v482 = vunpack.c.h.b16 %v440
          %v483 = vunpack.c.l.b16 %v441
          %v484 = vunpack.c.h.b16 %v441
          %v485 = vunpack.c.l.b16 %v442
          %v486 = vunpack.c.h.b16 %v442
          %v487 = vunpack.c.l.b16 %v443
          %v488 = vunpack.c.h.b16 %v443
          %v489 = vunpack.c.l.b16 %v444
          %v490 = vunpack.c.h.b16 %v444
          %v491 = vunpack.c.l.b16 %v445
          %v492 = vunpack.c.h.b16 %v445
          %v493 = vunpack.c.l.b16 %v446
          %v494 = vunpack.c.h.b16 %v446
          %v495 = vpack.c.b16 %v463, %v463
          %v496 = vpack.c.b16 %v464, %v464
          %v497 = vpack.c.b16 %v465, %v465
          %v498 = vpack.c.b16 %v466, %v466
          %v499 = vpack.c.b16 %v467, %v467
          %v500 = vpack.c.b16 %v468, %v468
          %v501 = vpack.c.b16 %v469, %v469
          %v502 = vpack.c.b16 %v470, %v470
          %v503 = vpack.c.b16 %v471, %v471
          %v504 = vpack.c.b16 %v472, %v472
          %v505 = vpack.c.b16 %v473, %v473
          %v506 = vpack.c.b16 %v474, %v474
          %v507 = vpack.c.b16 %v475, %v475
          %v508 = vpack.c.b16 %v476, %v476
          %v509 = vpack.c.b16 %v477, %v477
          %v510 = vpack.c.b16 %v478, %v478
          %v511 = vpack.c.b16 %v479, %v479
          %v512 = vpack.c.b16 %v480, %v480
          %v513 = vpack.c.b16 %v481, %v481
          %v514 = vpack.c.b16 %v482, %v482
          %v515 = vpack.c.b16 %v483, %v483
          %v516 = vpack.c.b16 %v484, %v484
          %v517 = vpack.c.b16 %v485, %v485
          %v518 = vpack.c.b16 %v486, %v486
          %v519 = vpack.c.b16 %v487, %v487
          %v520 = vpack.c.b16 %v488, %v488
          %v521 = vpack.c.b16 %v489, %v489
          %v522 = vpack.c.b16 %v490, %v490
          %v523 = vpack.c.b16 %v491, %v491
          %v524 = vpack.c.b16 %v492, %v492
          %v525 = vpack.c.b16 %v493, %v493
          %v526 = vpack.c.b16 %v494, %v494
          %vm559 = vcmask 27648
          %560 = vst.msk [vmem:[#allocation2] sm:$0xf] %vm559, %v495
          %561 = vst.msk [vmem:[#allocation2 + $0x4] sm:$0xf] %vm559, %v496
          %562 = vst.msk [vmem:[#allocation2 + $0x8] sm:$0xf] %vm559, %v497
          %563 = vst.msk [vmem:[#allocation2 + $0xc] sm:$0xf] %vm559, %v498
          %564 = vst.msk [vmem:[#allocation2 + $0x10] sm:$0xf] %vm559, %v499
          %565 = vst.msk [vmem:[#allocation2 + $0x14] sm:$0xf] %vm559, %v500
          %566 = vst.msk [vmem:[#allocation2 + $0x18] sm:$0xf] %vm559, %v501
          %567 = vst.msk [vmem:[#allocation2 + $0x1c] sm:$0xf] %vm559, %v502
          %568 = vst.msk [vmem:[#allocation2 + $0x20] sm:$0xf] %vm559, %v503
          %569 = vst.msk [vmem:[#allocation2 + $0x24] sm:$0xf] %vm559, %v504
          %570 = vst.msk [vmem:[#allocation2 + $0x28] sm:$0xf] %vm559, %v505
          %571 = vst.msk [vmem:[#allocation2 + $0x2c] sm:$0xf] %vm559, %v506
          %572 = vst.msk [vmem:[#allocation2 + $0x30] sm:$0xf] %vm559, %v507
          %573 = vst.msk [vmem:[#allocation2 + $0x34] sm:$0xf] %vm559, %v508
          %574 = vst.msk [vmem:[#allocation2 + $0x38] sm:$0xf] %vm559, %v509
          %575 = vst.msk [vmem:[#allocation2 + $0x3c] sm:$0xf] %vm559, %v510
          %576 = vst.msk [vmem:[#allocation2 + $0x40] sm:$0xf] %vm559, %v511
          %577 = vst.msk [vmem:[#allocation2 + $0x44] sm:$0xf] %vm559, %v512
          %578 = vst.msk [vmem:[#allocation2 + $0x48] sm:$0xf] %vm559, %v513
          %579 = vst.msk [vmem:[#allocation2 + $0x4c] sm:$0xf] %vm559, %v514
          %580 = vst.msk [vmem:[#allocation2 + $0x50] sm:$0xf] %vm559, %v515
          %581 = vst.msk [vmem:[#allocation2 + $0x54] sm:$0xf] %vm559, %v516
          %582 = vst.msk [vmem:[#allocation2 + $0x58] sm:$0xf] %vm559, %v517
          %583 = vst.msk [vmem:[#allocation2 + $0x5c] sm:$0xf] %vm559, %v518
          %584 = vst.msk [vmem:[#allocation2 + $0x60] sm:$0xf] %vm559, %v519
          %585 = vst.msk [vmem:[#allocation2 + $0x64] sm:$0xf] %vm559, %v520
          %586 = vst.msk [vmem:[#allocation2 + $0x68] sm:$0xf] %vm559, %v521
          %587 = vst.msk [vmem:[#allocation2 + $0x6c] sm:$0xf] %vm559, %v522
          %588 = vst.msk [vmem:[#allocation2 + $0x70] sm:$0xf] %vm559, %v523
          %589 = vst.msk [vmem:[#allocation2 + $0x74] sm:$0xf] %vm559, %v524
          %590 = vst.msk [vmem:[#allocation2 + $0x78] sm:$0xf] %vm559, %v525
          %591 = vst.msk [vmem:[#allocation2 + $0x7c] sm:$0xf] %vm559, %v526
          %592 = vrot.lane.b32.xlu0 %v495, 124
          %v593 = vpop.permute.xlu0 %592
          %594 = vrot.lane.b32.xlu0 %v496, 124
          %v595 = vpop.permute.xlu0 %594
          %596 = vrot.lane.b32.xlu0 %v497, 124
          %v597 = vpop.permute.xlu0 %596
          %598 = vrot.lane.b32.xlu0 %v498, 124
          %v599 = vpop.permute.xlu0 %598
          %600 = vrot.lane.b32.xlu0 %v499, 124
          %v601 = vpop.permute.xlu0 %600
          %602 = vrot.lane.b32.xlu0 %v500, 124
          %v603 = vpop.permute.xlu0 %602
          %604 = vrot.lane.b32.xlu0 %v501, 124
          %v605 = vpop.permute.xlu0 %604
          %606 = vrot.lane.b32.xlu0 %v502, 124
          %v607 = vpop.permute.xlu0 %606
          %608 = vrot.lane.b32.xlu0 %v503, 124
          %v609 = vpop.permute.xlu0 %608
          %610 = vrot.lane.b32.xlu0 %v504, 124
          %v611 = vpop.permute.xlu0 %610
          %612 = vrot.lane.b32.xlu0 %v505, 124
          %v613 = vpop.permute.xlu0 %612
          %614 = vrot.lane.b32.xlu0 %v506, 124
          %v615 = vpop.permute.xlu0 %614
          %616 = vrot.lane.b32.xlu0 %v507, 124
          %v617 = vpop.permute.xlu0 %616
          %618 = vrot.lane.b32.xlu0 %v508, 124
          %v619 = vpop.permute.xlu0 %618
          %620 = vrot.lane.b32.xlu0 %v509, 124
          %v621 = vpop.permute.xlu0 %620
          %622 = vrot.lane.b32.xlu0 %v510, 124
          %v623 = vpop.permute.xlu0 %622
          %624 = vrot.lane.b32.xlu0 %v511, 124
          %v625 = vpop.permute.xlu0 %624
          %626 = vrot.lane.b32.xlu0 %v512, 124
          %v627 = vpop.permute.xlu0 %626
          %628 = vrot.lane.b32.xlu0 %v513, 124
          %v629 = vpop.permute.xlu0 %628
          %630 = vrot.lane.b32.xlu0 %v514, 124
          %v631 = vpop.permute.xlu0 %630
          %632 = vrot.lane.b32.xlu0 %v515, 124
          %v633 = vpop.permute.xlu0 %632
          %634 = vrot.lane.b32.xlu0 %v516, 124
          %v635 = vpop.permute.xlu0 %634
          %636 = vrot.lane.b32.xlu0 %v517, 124
          %v637 = vpop.permute.xlu0 %636
          %638 = vrot.lane.b32.xlu0 %v518, 124
          %v639 = vpop.permute.xlu0 %638
          %640 = vrot.lane.b32.xlu0 %v519, 124
          %v641 = vpop.permute.xlu0 %640
          %642 = vrot.lane.b32.xlu0 %v520, 124
          %v643 = vpop.permute.xlu0 %642
          %644 = vrot.lane.b32.xlu0 %v521, 124
          %v645 = vpop.permute.xlu0 %644
          %646 = vrot.lane.b32.xlu0 %v522, 124
          %v647 = vpop.permute.xlu0 %646
          %648 = vrot.lane.b32.xlu0 %v523, 124
          %v649 = vpop.permute.xlu0 %648
          %650 = vrot.lane.b32.xlu0 %v524, 124
          %v651 = vpop.permute.xlu0 %650
          %652 = vrot.lane.b32.xlu0 %v525, 124
          %v653 = vpop.permute.xlu0 %652
          %654 = vrot.lane.b32.xlu0 %v526, 124
          %v655 = vpop.permute.xlu0 %654
          %688 = vst.msk [vmem:[#allocation3] sm:$0xf] %vm559, %v593
          %689 = vst.msk [vmem:[#allocation3 + $0x4] sm:$0xf] %vm559, %v595
          %690 = vst.msk [vmem:[#allocation3 + $0x8] sm:$0xf] %vm559, %v597
          %691 = vst.msk [vmem:[#allocation3 + $0xc] sm:$0xf] %vm559, %v599
          %692 = vst.msk [vmem:[#allocation3 + $0x10] sm:$0xf] %vm559, %v601
          %693 = vst.msk [vmem:[#allocation3 + $0x14] sm:$0xf] %vm559, %v603
          %694 = vst.msk [vmem:[#allocation3 + $0x18] sm:$0xf] %vm559, %v605
          %695 = vst.msk [vmem:[#allocation3 + $0x1c] sm:$0xf] %vm559, %v607
          %696 = vst.msk [vmem:[#allocation3 + $0x20] sm:$0xf] %vm559, %v609
          %697 = vst.msk [vmem:[#allocation3 + $0x24] sm:$0xf] %vm559, %v611
          %698 = vst.msk [vmem:[#allocation3 + $0x28] sm:$0xf] %vm559, %v613
          %699 = vst.msk [vmem:[#allocation3 + $0x2c] sm:$0xf] %vm559, %v615
          %700 = vst.msk [vmem:[#allocation3 + $0x30] sm:$0xf] %vm559, %v617
          %701 = vst.msk [vmem:[#allocation3 + $0x34] sm:$0xf] %vm559, %v619
          %702 = vst.msk [vmem:[#allocation3 + $0x38] sm:$0xf] %vm559, %v621
          %703 = vst.msk [vmem:[#allocation3 + $0x3c] sm:$0xf] %vm559, %v623
          %704 = vst.msk [vmem:[#allocation3 + $0x40] sm:$0xf] %vm559, %v625
          %705 = vst.msk [vmem:[#allocation3 + $0x44] sm:$0xf] %vm559, %v627
          %706 = vst.msk [vmem:[#allocation3 + $0x48] sm:$0xf] %vm559, %v629
          %707 = vst.msk [vmem:[#allocation3 + $0x4c] sm:$0xf] %vm559, %v631
          %708 = vst.msk [vmem:[#allocation3 + $0x50] sm:$0xf] %vm559, %v633
          %709 = vst.msk [vmem:[#allocation3 + $0x54] sm:$0xf] %vm559, %v635
          %710 = vst.msk [vmem:[#allocation3 + $0x58] sm:$0xf] %vm559, %v637
          %711 = vst.msk [vmem:[#allocation3 + $0x5c] sm:$0xf] %vm559, %v639
          %712 = vst.msk [vmem:[#allocation3 + $0x60] sm:$0xf] %vm559, %v641
          %713 = vst.msk [vmem:[#allocation3 + $0x64] sm:$0xf] %vm559, %v643
          %714 = vst.msk [vmem:[#allocation3 + $0x68] sm:$0xf] %vm559, %v645
          %715 = vst.msk [vmem:[#allocation3 + $0x6c] sm:$0xf] %vm559, %v647
          %716 = vst.msk [vmem:[#allocation3 + $0x70] sm:$0xf] %vm559, %v649
          %717 = vst.msk [vmem:[#allocation3 + $0x74] sm:$0xf] %vm559, %v651
          %718 = vst.msk [vmem:[#allocation3 + $0x78] sm:$0xf] %vm559, %v653
          %719 = vst.msk [vmem:[#allocation3 + $0x7c] sm:$0xf] %vm559, %v655
          %v720 = vpack.c.bf16 %v351, %v345
          %v721 = vpack.c.bf16 %v353, %v347
          %v722 = vpack.c.bf16 %v361, %v355
          %v723 = vpack.c.bf16 %v363, %v357
          %v728 = vunpack.c.l.b16 %v720
          %v729 = vunpack.c.l.b16 %v721
          %v730 = vunpack.c.h.b16 %v720
          %v731 = vunpack.c.h.b16 %v721
          %v732 = vunpack.c.l.b16 %v722
          %v733 = vunpack.c.l.b16 %v723
          %v734 = vunpack.c.h.b16 %v722
          %v735 = vunpack.c.h.b16 %v723
          %v736 = vpack.c.b16 %v729, %v728
          %v737 = vpack.c.b16 %v731, %v730
          %v738 = vpack.c.b16 %v733, %v732
          %v739 = vpack.c.b16 %v735, %v734
          %744 = vst [vmem:[#allocation4] sm:$0xff] %v736
          %745 = vst [vmem:[#allocation4 + $0x8] sm:$0xff] %v737
          %746 = vst [vmem:[#allocation4 + $0x10] sm:$0xff] %v738
          %747 = vst [vmem:[#allocation4 + $0x18] sm:$0xff] %v739
        $region44: #{tpu_custom_call.1} parent=35 // pred_fallthru
          _
        %s748 = smul.u32 %s27, 128
        %s749 = sshra.s32 %s748, 3
        %s750 = sand.u32 %s748, 7
        %s751 = smul.addr %s749, 4
        %s752 = scalar_lea.vmem [#allocation2], %s751
        %v753 = vld [vmem:[%s752] sm:$0xf]
        %v754 = vld [vmem:[%s752 + $0x4] sm:$0xf]
        %v755 = vld [vmem:[%s752 + $0x8] sm:$0xf]
        %v756 = vld [vmem:[%s752 + $0xc] sm:$0xf]
        %v757 = vld [vmem:[%s752 + $0x10] sm:$0xf]
        %v758 = vld [vmem:[%s752 + $0x14] sm:$0xf]
        %v759 = vld [vmem:[%s752 + $0x18] sm:$0xf]
        %v760 = vld [vmem:[%s752 + $0x1c] sm:$0xf]
        %v761 = vld [vmem:[%s752 + $0x20] sm:$0xf]
        %v762 = vld [vmem:[%s752 + $0x24] sm:$0xf]
        %v763 = vld [vmem:[%s752 + $0x28] sm:$0xf]
        %v764 = vld [vmem:[%s752 + $0x2c] sm:$0xf]
        %v765 = vld [vmem:[%s752 + $0x30] sm:$0xf]
        %v766 = vld [vmem:[%s752 + $0x34] sm:$0xf]
        %v767 = vld [vmem:[%s752 + $0x38] sm:$0xf]
        %v768 = vld [vmem:[%s752 + $0x3c] sm:$0xf]
        %v769 = vld [vmem:[#allocation3] sm:$0xf]
        %v770 = vld [vmem:[#allocation3 + $0x4] sm:$0xf]
        %v771 = vld [vmem:[#allocation3 + $0x8] sm:$0xf]
        %v772 = vld [vmem:[#allocation3 + $0xc] sm:$0xf]
        %v773 = vld [vmem:[#allocation3 + $0x10] sm:$0xf]
        %v774 = vld [vmem:[#allocation3 + $0x14] sm:$0xf]
        %v775 = vld [vmem:[#allocation3 + $0x18] sm:$0xf]
        %v776 = vld [vmem:[#allocation3 + $0x1c] sm:$0xf]
        %v777 = vld [vmem:[#allocation3 + $0x20] sm:$0xf]
        %v778 = vld [vmem:[#allocation3 + $0x24] sm:$0xf]
        %v779 = vld [vmem:[#allocation3 + $0x28] sm:$0xf]
        %v780 = vld [vmem:[#allocation3 + $0x2c] sm:$0xf]
        %v781 = vld [vmem:[#allocation3 + $0x30] sm:$0xf]
        %v782 = vld [vmem:[#allocation3 + $0x34] sm:$0xf]
        %v783 = vld [vmem:[#allocation3 + $0x38] sm:$0xf]
        %v784 = vld [vmem:[#allocation3 + $0x3c] sm:$0xf]
        %v785 = vld [vmem:[#allocation3 + $0x40] sm:$0xf]
        %v786 = vld [vmem:[#allocation3 + $0x44] sm:$0xf]
        %v787 = vld [vmem:[#allocation3 + $0x48] sm:$0xf]
        %v788 = vld [vmem:[#allocation3 + $0x4c] sm:$0xf]
        %v789 = vld [vmem:[#allocation3 + $0x50] sm:$0xf]
        %v790 = vld [vmem:[#allocation3 + $0x54] sm:$0xf]
        %v791 = vld [vmem:[#allocation3 + $0x58] sm:$0xf]
        %v792 = vld [vmem:[#allocation3 + $0x5c] sm:$0xf]
        %v793 = vld [vmem:[#allocation3 + $0x60] sm:$0xf]
        %v794 = vld [vmem:[#allocation3 + $0x64] sm:$0xf]
        %v795 = vld [vmem:[#allocation3 + $0x68] sm:$0xf]
        %v796 = vld [vmem:[#allocation3 + $0x6c] sm:$0xf]
        %v797 = vld [vmem:[#allocation3 + $0x70] sm:$0xf]
        %v798 = vld [vmem:[#allocation3 + $0x74] sm:$0xf]
        %v799 = vld [vmem:[#allocation3 + $0x78] sm:$0xf]
        %v800 = vld [vmem:[#allocation3 + $0x7c] sm:$0xf]
        %v817 = vunpack.c.l.b16 %v753
        %v818 = vunpack.c.l.b16 %v754
        %v819 = vunpack.c.l.b16 %v755
        %v820 = vunpack.c.l.b16 %v756
        %v821 = vunpack.c.l.b16 %v757
        %v822 = vunpack.c.l.b16 %v758
        %v823 = vunpack.c.l.b16 %v759
        %v824 = vunpack.c.l.b16 %v760
        %v825 = vunpack.c.l.b16 %v761
        %v826 = vunpack.c.l.b16 %v762
        %v827 = vunpack.c.l.b16 %v763
        %v828 = vunpack.c.l.b16 %v764
        %v829 = vunpack.c.l.b16 %v765
        %v830 = vunpack.c.l.b16 %v766
        %v831 = vunpack.c.l.b16 %v767
        %v832 = vunpack.c.l.b16 %v768
        %v833 = vpack.c.b16 %v818, %v817
        %v834 = vpack.c.b16 %v820, %v819
        %v835 = vpack.c.b16 %v822, %v821
        %v836 = vpack.c.b16 %v824, %v823
        %v837 = vpack.c.b16 %v826, %v825
        %v838 = vpack.c.b16 %v828, %v827
        %v839 = vpack.c.b16 %v830, %v829
        %v840 = vpack.c.b16 %v832, %v831
        %v873 = vunpack.c.l.b16 %v769
        %v874 = vunpack.c.l.b16 %v770
        %v875 = vunpack.c.l.b16 %v771
        %v876 = vunpack.c.l.b16 %v772
        %v877 = vunpack.c.l.b16 %v773
        %v878 = vunpack.c.l.b16 %v774
        %v879 = vunpack.c.l.b16 %v775
        %v880 = vunpack.c.l.b16 %v776
        %v881 = vunpack.c.l.b16 %v777
        %v882 = vunpack.c.l.b16 %v778
        %v883 = vunpack.c.l.b16 %v779
        %v884 = vunpack.c.l.b16 %v780
        %v885 = vunpack.c.l.b16 %v781
        %v886 = vunpack.c.l.b16 %v782
        %v887 = vunpack.c.l.b16 %v783
        %v888 = vunpack.c.l.b16 %v784
        %v889 = vunpack.c.l.b16 %v785
        %v890 = vunpack.c.l.b16 %v786
        %v891 = vunpack.c.l.b16 %v787
        %v892 = vunpack.c.l.b16 %v788
        %v893 = vunpack.c.l.b16 %v789
        %v894 = vunpack.c.l.b16 %v790
        %v895 = vunpack.c.l.b16 %v791
        %v896 = vunpack.c.l.b16 %v792
        %v897 = vunpack.c.l.b16 %v793
        %v898 = vunpack.c.l.b16 %v794
        %v899 = vunpack.c.l.b16 %v795
        %v900 = vunpack.c.l.b16 %v796
        %v901 = vunpack.c.l.b16 %v797
        %v902 = vunpack.c.l.b16 %v798
        %v903 = vunpack.c.l.b16 %v799
        %v904 = vunpack.c.l.b16 %v800
        %v905 = vpack.c.b16 %v874, %v873
        %v906 = vpack.c.b16 %v876, %v875
        %v907 = vpack.c.b16 %v878, %v877
        %v908 = vpack.c.b16 %v880, %v879
        %v909 = vpack.c.b16 %v882, %v881
        %v910 = vpack.c.b16 %v884, %v883
        %v911 = vpack.c.b16 %v886, %v885
        %v912 = vpack.c.b16 %v888, %v887
        %v913 = vpack.c.b16 %v890, %v889
        %v914 = vpack.c.b16 %v892, %v891
        %v915 = vpack.c.b16 %v894, %v893
        %v916 = vpack.c.b16 %v896, %v895
        %v917 = vpack.c.b16 %v898, %v897
        %v918 = vpack.c.b16 %v900, %v899
        %v919 = vpack.c.b16 %v902, %v901
        %v920 = vpack.c.b16 %v904, %v903
        %vm921 = vcmask 31744
        %v923 = vsel %vm921, %v833, 0
        %v926 = vsel %vm921, %v834, 0
        %v929 = vsel %vm921, %v835, 0
        %v932 = vsel %vm921, %v836, 0
        %v935 = vsel %vm921, %v837, 0
        %v938 = vsel %vm921, %v838, 0
        %v941 = vsel %vm921, %v839, 0
        %v944 = vsel %vm921, %v840, 0
        %v947 = vsel %vm921, %v905, 0
        %v950 = vsel %vm921, %v906, 0
        %v953 = vsel %vm921, %v907, 0
        %v956 = vsel %vm921, %v908, 0
        %v959 = vsel %vm921, %v909, 0
        %v962 = vsel %vm921, %v910, 0
        %v965 = vsel %vm921, %v911, 0
        %v968 = vsel %vm921, %v912, 0
        %v971 = vsel %vm921, %v913, 0
        %v974 = vsel %vm921, %v914, 0
        %v977 = vsel %vm921, %v915, 0
        %v980 = vsel %vm921, %v916, 0
        %v983 = vsel %vm921, %v917, 0
        %v986 = vsel %vm921, %v918, 0
        %v989 = vsel %vm921, %v919, 0
        %v992 = vsel %vm921, %v920, 0
        %994 = vmatprep.subr.bf16.mxu0 0
        %995 = vmatpush1.bf16.xpose.msra.mxu0 %v968
        %996 = vmatprep.subr.bf16.mxu0 0
        %997 = vmatpush1.bf16.xpose.msra.mxu0 %v965
        %998 = vmatprep.subr.bf16.mxu0 0
        %999 = vmatpush1.bf16.xpose.msra.mxu0 %v962
        %1000 = vmatprep.subr.bf16.mxu0 0
        %1001 = vmatpush1.bf16.xpose.msra.mxu0 %v959
        %1002 = vmatprep.subr.bf16.mxu0 0
        %1003 = vmatpush1.bf16.xpose.msra.mxu0 %v956
        %1004 = vmatprep.subr.bf16.mxu0 0
        %1005 = vmatpush1.bf16.xpose.msra.mxu0 %v953
        %1006 = vmatprep.subr.bf16.mxu0 0
        %1007 = vmatpush1.bf16.xpose.msra.mxu0 %v950
        %1008 = vmatprep.subr.bf16.mxu0 0
        %1009 = vmatpush1.bf16.xpose.msra.mxu0 %v947
        %1010 = vmatprep.subr.bf16.mxu0 0
        %1011 = vmatpush2.bf16.xpose.msra.mxu0 %v992
        %1012 = vmatprep.subr.bf16.mxu0 0
        %1013 = vmatpush2.bf16.xpose.msra.mxu0 %v989
        %1014 = vmatprep.subr.bf16.mxu0 0
        %1015 = vmatpush2.bf16.xpose.msra.mxu0 %v986
        %1016 = vmatprep.subr.bf16.mxu0 0
        %1017 = vmatpush2.bf16.xpose.msra.mxu0 %v983
        %1018 = vmatprep.subr.bf16.mxu0 0
        %1019 = vmatpush2.bf16.xpose.msra.mxu0 %v980
        %1020 = vmatprep.subr.bf16.mxu0 0
        %1021 = vmatpush2.bf16.xpose.msra.mxu0 %v977
        %1022 = vmatprep.subr.bf16.mxu0 0
        %1023 = vmatpush2.bf16.xpose.msra.mxu0 %v974
        %1024 = vmatprep.subr.bf16.mxu0 0
        %1025 = vmatpush2.bf16.xpose.msra.mxu0 %v971
        %1026 = vmatprep.mubr.bf16.mxu0 0
        %1027 = vmatmul.mubr.bf16.gmra.mxu0 %v923
        %v1028 = vpop.f32.mrf.mxu0
        %v1029 = vadd.f32 0.0, %v1028
        %v1030 = vpop.f32.mrf.mxu0
        %v1031 = vadd.f32 0.0, %v1030
        %v1032 = vpop.f32.mrf.mxu0
        %v1033 = vadd.f32 0.0, %v1032
        %v1034 = vpop.f32.mrf.mxu0
        %v1035 = vadd.f32 0.0, %v1034
        %1036 = vmatprep.mubr.bf16.mxu0 0
        %1037 = vmatmul.mubr.bf16.gmra.mxu0 %v926
        %v1038 = vpop.f32.mrf.mxu0
        %v1039 = vadd.f32 0.0, %v1038
        %v1040 = vpop.f32.mrf.mxu0
        %v1041 = vadd.f32 0.0, %v1040
        %v1042 = vpop.f32.mrf.mxu0
        %v1043 = vadd.f32 0.0, %v1042
        %v1044 = vpop.f32.mrf.mxu0
        %v1045 = vadd.f32 0.0, %v1044
        %1046 = vmatprep.mubr.bf16.mxu0 0
        %1047 = vmatmul.mubr.bf16.gmra.mxu0 %v929
        %v1048 = vpop.f32.mrf.mxu0
        %v1049 = vadd.f32 0.0, %v1048
        %v1050 = vpop.f32.mrf.mxu0
        %v1051 = vadd.f32 0.0, %v1050
        %v1052 = vpop.f32.mrf.mxu0
        %v1053 = vadd.f32 0.0, %v1052
        %v1054 = vpop.f32.mrf.mxu0
        %v1055 = vadd.f32 0.0, %v1054
        %1056 = vmatprep.mubr.bf16.mxu0 0
        %1057 = vmatmul.mubr.bf16.gmra.mxu0 %v932
        %v1058 = vpop.f32.mrf.mxu0
        %v1059 = vadd.f32 0.0, %v1058
        %v1060 = vpop.f32.mrf.mxu0
        %v1061 = vadd.f32 0.0, %v1060
        %v1062 = vpop.f32.mrf.mxu0
        %v1063 = vadd.f32 0.0, %v1062
        %v1064 = vpop.f32.mrf.mxu0
        %v1065 = vadd.f32 0.0, %v1064
        %1066 = vmatprep.mubr.bf16.mxu0 0
        %1067 = vmatmul.mubr.bf16.gmra.mxu0 %v935
        %v1068 = vpop.f32.mrf.mxu0
        %v1069 = vadd.f32 0.0, %v1068
        %v1070 = vpop.f32.mrf.mxu0
        %v1071 = vadd.f32 0.0, %v1070
        %v1072 = vpop.f32.mrf.mxu0
        %v1073 = vadd.f32 0.0, %v1072
        %v1074 = vpop.f32.mrf.mxu0
        %v1075 = vadd.f32 0.0, %v1074
        %1076 = vmatprep.mubr.bf16.mxu0 0
        %1077 = vmatmul.mubr.bf16.gmra.mxu0 %v938
        %v1078 = vpop.f32.mrf.mxu0
        %v1079 = vadd.f32 0.0, %v1078
        %v1080 = vpop.f32.mrf.mxu0
        %v1081 = vadd.f32 0.0, %v1080
        %v1082 = vpop.f32.mrf.mxu0
        %v1083 = vadd.f32 0.0, %v1082
        %v1084 = vpop.f32.mrf.mxu0
        %v1085 = vadd.f32 0.0, %v1084
        %1086 = vmatprep.mubr.bf16.mxu0 0
        %1087 = vmatmul.mubr.bf16.gmra.mxu0 %v941
        %v1088 = vpop.f32.mrf.mxu0
        %v1089 = vadd.f32 0.0, %v1088
        %v1090 = vpop.f32.mrf.mxu0
        %v1091 = vadd.f32 0.0, %v1090
        %v1092 = vpop.f32.mrf.mxu0
        %v1093 = vadd.f32 0.0, %v1092
        %v1094 = vpop.f32.mrf.mxu0
        %v1095 = vadd.f32 0.0, %v1094
        %1096 = vmatprep.mubr.bf16.mxu0 0
        %1097 = vmatmul.mubr.bf16.gmra.mxu0 %v944
        %v1098 = vpop.f32.mrf.mxu0
        %v1099 = vadd.f32 0.0, %v1098
        %v1100 = vpop.f32.mrf.mxu0
        %v1101 = vadd.f32 0.0, %v1100
        %v1102 = vpop.f32.mrf.mxu0
        %v1103 = vadd.f32 0.0, %v1102
        %v1104 = vpop.f32.mrf.mxu0
        %v1105 = vadd.f32 0.0, %v1104
        %1106 = vdwg.mxu0
        %v1107 = vmax.f32 %v1029, %v1031
        %1108 = vmax.xlane.f32.xlu0 %v1107
        %v1109 = vpop.xlane.xlu0 %1108
        %v1110 = vmax.f32 %v1033, %v1035
        %1111 = vmax.xlane.f32.xlu0 %v1110
        %v1112 = vpop.xlane.xlu0 %1111
        %v1113 = vmax.f32 %v1039, %v1041
        %1114 = vmax.xlane.f32.xlu0 %v1113
        %v1115 = vpop.xlane.xlu0 %1114
        %v1116 = vmax.f32 %v1043, %v1045
        %1117 = vmax.xlane.f32.xlu0 %v1116
        %v1118 = vpop.xlane.xlu0 %1117
        %v1119 = vmax.f32 %v1049, %v1051
        %1120 = vmax.xlane.f32.xlu0 %v1119
        %v1121 = vpop.xlane.xlu0 %1120
        %v1122 = vmax.f32 %v1053, %v1055
        %1123 = vmax.xlane.f32.xlu0 %v1122
        %v1124 = vpop.xlane.xlu0 %1123
        %v1125 = vmax.f32 %v1059, %v1061
        %1126 = vmax.xlane.f32.xlu0 %v1125
        %v1127 = vpop.xlane.xlu0 %1126
        %v1128 = vmax.f32 %v1063, %v1065
        %1129 = vmax.xlane.f32.xlu0 %v1128
        %v1130 = vpop.xlane.xlu0 %1129
        %v1131 = vmax.f32 %v1069, %v1071
        %1132 = vmax.xlane.f32.xlu0 %v1131
        %v1133 = vpop.xlane.xlu0 %1132
        %v1134 = vmax.f32 %v1073, %v1075
        %1135 = vmax.xlane.f32.xlu0 %v1134
        %v1136 = vpop.xlane.xlu0 %1135
        %v1137 = vmax.f32 %v1079, %v1081
        %1138 = vmax.xlane.f32.xlu0 %v1137
        %v1139 = vpop.xlane.xlu0 %1138
        %v1140 = vmax.f32 %v1083, %v1085
        %1141 = vmax.xlane.f32.xlu0 %v1140
        %v1142 = vpop.xlane.xlu0 %1141
        %v1143 = vmax.f32 %v1089, %v1091
        %1144 = vmax.xlane.f32.xlu0 %v1143
        %v1145 = vpop.xlane.xlu0 %1144
        %v1146 = vmax.f32 %v1093, %v1095
        %1147 = vmax.xlane.f32.xlu0 %v1146
        %v1148 = vpop.xlane.xlu0 %1147
        %v1149 = vmax.f32 %v1099, %v1101
        %1150 = vmax.xlane.f32.xlu0 %v1149
        %v1151 = vpop.xlane.xlu0 %1150
        %v1152 = vmax.f32 %v1103, %v1105
        %1153 = vmax.xlane.f32.xlu0 %v1152
        %v1154 = vpop.xlane.xlu0 %1153
        %v1155 = vsub.f32 %v1029, %v1109
        %v1156 = vsub.f32 %v1031, %v1109
        %v1157 = vsub.f32 %v1033, %v1112
        %v1158 = vsub.f32 %v1035, %v1112
        %v1159 = vsub.f32 %v1039, %v1115
        %v1160 = vsub.f32 %v1041, %v1115
        %v1161 = vsub.f32 %v1043, %v1118
        %v1162 = vsub.f32 %v1045, %v1118
        %v1163 = vsub.f32 %v1049, %v1121
        %v1164 = vsub.f32 %v1051, %v1121
        %v1165 = vsub.f32 %v1053, %v1124
        %v1166 = vsub.f32 %v1055, %v1124
        %v1167 = vsub.f32 %v1059, %v1127
        %v1168 = vsub.f32 %v1061, %v1127
        %v1169 = vsub.f32 %v1063, %v1130
        %v1170 = vsub.f32 %v1065, %v1130
        %v1171 = vsub.f32 %v1069, %v1133
        %v1172 = vsub.f32 %v1071, %v1133
        %v1173 = vsub.f32 %v1073, %v1136
        %v1174 = vsub.f32 %v1075, %v1136
        %v1175 = vsub.f32 %v1079, %v1139
        %v1176 = vsub.f32 %v1081, %v1139
        %v1177 = vsub.f32 %v1083, %v1142
        %v1178 = vsub.f32 %v1085, %v1142
        %v1179 = vsub.f32 %v1089, %v1145
        %v1180 = vsub.f32 %v1091, %v1145
        %v1181 = vsub.f32 %v1093, %v1148
        %v1182 = vsub.f32 %v1095, %v1148
        %v1183 = vsub.f32 %v1099, %v1151
        %v1184 = vsub.f32 %v1101, %v1151
        %v1185 = vsub.f32 %v1103, %v1154
        %v1186 = vsub.f32 %v1105, %v1154
        %v1187 = vmul.f32 %v1155, 1.442695
        %v1188 = vpow.pop %v1187
        %v1189 = vmul.f32 %v1156, 1.442695
        %v1190 = vpow.pop %v1189
        %v1191 = vmul.f32 %v1157, 1.442695
        %v1192 = vpow.pop %v1191
        %v1193 = vmul.f32 %v1158, 1.442695
        %v1194 = vpow.pop %v1193
        %v1195 = vmul.f32 %v1159, 1.442695
        %v1196 = vpow.pop %v1195
        %v1197 = vmul.f32 %v1160, 1.442695
        %v1198 = vpow.pop %v1197
        %v1199 = vmul.f32 %v1161, 1.442695
        %v1200 = vpow.pop %v1199
        %v1201 = vmul.f32 %v1162, 1.442695
        %v1202 = vpow.pop %v1201
        %v1203 = vmul.f32 %v1163, 1.442695
        %v1204 = vpow.pop %v1203
        %v1205 = vmul.f32 %v1164, 1.442695
        %v1206 = vpow.pop %v1205
        %v1207 = vmul.f32 %v1165, 1.442695
        %v1208 = vpow.pop %v1207
        %v1209 = vmul.f32 %v1166, 1.442695
        %v1210 = vpow.pop %v1209
        %v1211 = vmul.f32 %v1167, 1.442695
        %v1212 = vpow.pop %v1211
        %v1213 = vmul.f32 %v1168, 1.442695
        %v1214 = vpow.pop %v1213
        %v1215 = vmul.f32 %v1169, 1.442695
        %v1216 = vpow.pop %v1215
        %v1217 = vmul.f32 %v1170, 1.442695
        %v1218 = vpow.pop %v1217
        %v1219 = vmul.f32 %v1171, 1.442695
        %v1220 = vpow.pop %v1219
        %v1221 = vmul.f32 %v1172, 1.442695
        %v1222 = vpow.pop %v1221
        %v1223 = vmul.f32 %v1173, 1.442695
        %v1224 = vpow.pop %v1223
        %v1225 = vmul.f32 %v1174, 1.442695
        %v1226 = vpow.pop %v1225
        %v1227 = vmul.f32 %v1175, 1.442695
        %v1228 = vpow.pop %v1227
        %v1229 = vmul.f32 %v1176, 1.442695
        %v1230 = vpow.pop %v1229
        %v1231 = vmul.f32 %v1177, 1.442695
        %v1232 = vpow.pop %v1231
        %v1233 = vmul.f32 %v1178, 1.442695
        %v1234 = vpow.pop %v1233
        %v1235 = vmul.f32 %v1179, 1.442695
        %v1236 = vpow.pop %v1235
        %v1237 = vmul.f32 %v1180, 1.442695
        %v1238 = vpow.pop %v1237
        %v1239 = vmul.f32 %v1181, 1.442695
        %v1240 = vpow.pop %v1239
        %v1241 = vmul.f32 %v1182, 1.442695
        %v1242 = vpow.pop %v1241
        %v1243 = vmul.f32 %v1183, 1.442695
        %v1244 = vpow.pop %v1243
        %v1245 = vmul.f32 %v1184, 1.442695
        %v1246 = vpow.pop %v1245
        %v1247 = vmul.f32 %v1185, 1.442695
        %v1248 = vpow.pop %v1247
        %v1249 = vmul.f32 %v1186, 1.442695
        %v1250 = vpow.pop %v1249
        %v1251 = vadd.f32 %v1188, %v1190
        %1252 = vadd.xlane.f32.xlu0 %v1251
        %v1253 = vpop.xlane.xlu0 %1252
        %v1254 = vadd.f32 %v1192, %v1194
        %1255 = vadd.xlane.f32.xlu0 %v1254
        %v1256 = vpop.xlane.xlu0 %1255
        %v1257 = vadd.f32 %v1196, %v1198
        %1258 = vadd.xlane.f32.xlu0 %v1257
        %v1259 = vpop.xlane.xlu0 %1258
        %v1260 = vadd.f32 %v1200, %v1202
        %1261 = vadd.xlane.f32.xlu0 %v1260
        %v1262 = vpop.xlane.xlu0 %1261
        %v1263 = vadd.f32 %v1204, %v1206
        %1264 = vadd.xlane.f32.xlu0 %v1263
        %v1265 = vpop.xlane.xlu0 %1264
        %v1266 = vadd.f32 %v1208, %v1210
        %1267 = vadd.xlane.f32.xlu0 %v1266
        %v1268 = vpop.xlane.xlu0 %1267
        %v1269 = vadd.f32 %v1212, %v1214
        %1270 = vadd.xlane.f32.xlu0 %v1269
        %v1271 = vpop.xlane.xlu0 %1270
        %v1272 = vadd.f32 %v1216, %v1218
        %1273 = vadd.xlane.f32.xlu0 %v1272
        %v1274 = vpop.xlane.xlu0 %1273
        %v1275 = vadd.f32 %v1220, %v1222
        %1276 = vadd.xlane.f32.xlu0 %v1275
        %v1277 = vpop.xlane.xlu0 %1276
        %v1278 = vadd.f32 %v1224, %v1226
        %1279 = vadd.xlane.f32.xlu0 %v1278
        %v1280 = vpop.xlane.xlu0 %1279
        %v1281 = vadd.f32 %v1228, %v1230
        %1282 = vadd.xlane.f32.xlu0 %v1281
        %v1283 = vpop.xlane.xlu0 %1282
        %v1284 = vadd.f32 %v1232, %v1234
        %1285 = vadd.xlane.f32.xlu0 %v1284
        %v1286 = vpop.xlane.xlu0 %1285
        %v1287 = vadd.f32 %v1236, %v1238
        %1288 = vadd.xlane.f32.xlu0 %v1287
        %v1289 = vpop.xlane.xlu0 %1288
        %v1290 = vadd.f32 %v1240, %v1242
        %1291 = vadd.xlane.f32.xlu0 %v1290
        %v1292 = vpop.xlane.xlu0 %1291
        %v1293 = vadd.f32 %v1244, %v1246
        %1294 = vadd.xlane.f32.xlu0 %v1293
        %v1295 = vpop.xlane.xlu0 %1294
        %v1296 = vadd.f32 %v1248, %v1250
        %1297 = vadd.xlane.f32.xlu0 %v1296
        %v1298 = vpop.xlane.xlu0 %1297
        %v1299 = vrcp.pop %v1253
        %v1300 = vrcp.pop %v1256
        %v1301 = vrcp.pop %v1259
        %v1302 = vrcp.pop %v1262
        %v1303 = vrcp.pop %v1265
        %v1304 = vrcp.pop %v1268
        %v1305 = vrcp.pop %v1271
        %v1306 = vrcp.pop %v1274
        %v1307 = vrcp.pop %v1277
        %v1308 = vrcp.pop %v1280
        %v1309 = vrcp.pop %v1283
        %v1310 = vrcp.pop %v1286
        %v1311 = vrcp.pop %v1289
        %v1312 = vrcp.pop %v1292
        %v1313 = vrcp.pop %v1295
        %v1314 = vrcp.pop %v1298
        %v1315 = vmul.f32 %v1188, %v1299
        %v1316 = vmul.f32 %v1190, %v1299
        %v1317 = vmul.f32 %v1192, %v1300
        %v1318 = vmul.f32 %v1194, %v1300
        %v1319 = vmul.f32 %v1196, %v1301
        %v1320 = vmul.f32 %v1198, %v1301
        %v1321 = vmul.f32 %v1200, %v1302
        %v1322 = vmul.f32 %v1202, %v1302
        %v1323 = vmul.f32 %v1204, %v1303
        %v1324 = vmul.f32 %v1206, %v1303
        %v1325 = vmul.f32 %v1208, %v1304
        %v1326 = vmul.f32 %v1210, %v1304
        %v1327 = vmul.f32 %v1212, %v1305
        %v1328 = vmul.f32 %v1214, %v1305
        %v1329 = vmul.f32 %v1216, %v1306
        %v1330 = vmul.f32 %v1218, %v1306
        %v1331 = vmul.f32 %v1220, %v1307
        %v1332 = vmul.f32 %v1222, %v1307
        %v1333 = vmul.f32 %v1224, %v1308
        %v1334 = vmul.f32 %v1226, %v1308
        %v1335 = vmul.f32 %v1228, %v1309
        %v1336 = vmul.f32 %v1230, %v1309
        %v1337 = vmul.f32 %v1232, %v1310
        %v1338 = vmul.f32 %v1234, %v1310
        %v1339 = vmul.f32 %v1236, %v1311
        %v1340 = vmul.f32 %v1238, %v1311
        %v1341 = vmul.f32 %v1240, %v1312
        %v1342 = vmul.f32 %v1242, %v1312
        %v1343 = vmul.f32 %v1244, %v1313
        %v1344 = vmul.f32 %v1246, %v1313
        %v1345 = vmul.f32 %v1248, %v1314
        %v1346 = vmul.f32 %v1250, %v1314
        %v1347 = vld [vmem:[#allocation4] sm:$0xff]
        %v1348 = vld [vmem:[#allocation4 + $0x8] sm:$0xff]
        %v1349 = vld [vmem:[#allocation4 + $0x10] sm:$0xff]
        %v1350 = vld [vmem:[#allocation4 + $0x18] sm:$0xff]
        %v1351 = vpack.c.bf16 %v1317, %v1315
        %v1352 = vpack.c.bf16 %v1318, %v1316
        %v1353 = vpack.c.bf16 %v1321, %v1319
        %v1354 = vpack.c.bf16 %v1322, %v1320
        %v1355 = vpack.c.bf16 %v1325, %v1323
        %v1356 = vpack.c.bf16 %v1326, %v1324
        %v1357 = vpack.c.bf16 %v1329, %v1327
        %v1358 = vpack.c.bf16 %v1330, %v1328
        %v1359 = vpack.c.bf16 %v1333, %v1331
        %v1360 = vpack.c.bf16 %v1334, %v1332
        %v1361 = vpack.c.bf16 %v1337, %v1335
        %v1362 = vpack.c.bf16 %v1338, %v1336
        %v1363 = vpack.c.bf16 %v1341, %v1339
        %v1364 = vpack.c.bf16 %v1342, %v1340
        %v1365 = vpack.c.bf16 %v1345, %v1343
        %v1366 = vpack.c.bf16 %v1346, %v1344
        %v1371 = vunpack.c.l.b16 %v1347
        %v1372 = vunpack.c.h.b16 %v1347
        %v1373 = vunpack.c.l.b16 %v1348
        %v1374 = vunpack.c.h.b16 %v1348
        %v1375 = vunpack.c.l.b16 %v1349
        %v1376 = vunpack.c.h.b16 %v1349
        %v1377 = vunpack.c.l.b16 %v1350
        %v1378 = vunpack.c.h.b16 %v1350
        %v1379 = vpack.c.b16 %v1373, %v1371
        %v1380 = vpack.c.b16 %v1374, %v1372
        %v1381 = vpack.c.b16 %v1377, %v1375
        %v1382 = vpack.c.b16 %v1378, %v1376
        %1387 = vmatprep.subr.bf16.mxu0 %v1366
        %1388 = vmatpush1.bf16.xpose.msra.mxu0 %v1365
        %1389 = vmatprep.subr.bf16.mxu0 %v1364
        %1390 = vmatpush1.bf16.xpose.msra.mxu0 %v1363
        %1391 = vmatprep.subr.bf16.mxu0 %v1362
        %1392 = vmatpush1.bf16.xpose.msra.mxu0 %v1361
        %1393 = vmatprep.subr.bf16.mxu0 %v1360
        %1394 = vmatpush1.bf16.xpose.msra.mxu0 %v1359
        %1395 = vmatprep.subr.bf16.mxu0 %v1358
        %1396 = vmatpush1.bf16.xpose.msra.mxu0 %v1357
        %1397 = vmatprep.subr.bf16.mxu0 %v1356
        %1398 = vmatpush1.bf16.xpose.msra.mxu0 %v1355
        %1399 = vmatprep.subr.bf16.mxu0 %v1354
        %1400 = vmatpush1.bf16.xpose.msra.mxu0 %v1353
        %1401 = vmatprep.subr.bf16.mxu0 %v1352
        %1402 = vmatpush1.bf16.xpose.msra.mxu0 %v1351
        %1403 = vmatprep.subr.bf16.mxu0 0
        %1404 = vmatpush2.bf16.xpose.msra.mxu0 0
        %1405 = vmatprep.subr.bf16.mxu0 0
        %1406 = vmatpush2.bf16.xpose.msra.mxu0 0
        %1407 = vmatprep.subr.bf16.mxu0 0
        %1408 = vmatpush2.bf16.xpose.msra.mxu0 0
        %1409 = vmatprep.subr.bf16.mxu0 0
        %1410 = vmatpush2.bf16.xpose.msra.mxu0 0
        %1411 = vmatprep.subr.bf16.mxu0 0
        %1412 = vmatpush2.bf16.xpose.msra.mxu0 0
        %1413 = vmatprep.subr.bf16.mxu0 0
        %1414 = vmatpush2.bf16.xpose.msra.mxu0 0
        %1415 = vmatprep.subr.bf16.mxu0 0
        %1416 = vmatpush2.bf16.xpose.msra.mxu0 0
        %1417 = vmatprep.subr.bf16.mxu0 0
        %1418 = vmatpush2.bf16.xpose.msra.mxu0 0
        %1419 = vmatprep.mubr.bf16.mxu0 %v1380
        %1420 = vmatmul.mubr.bf16.gmra.mxu0 %v1379
        %v1421 = vpop.f32.mrf.mxu0
        %v1422 = vadd.f32 0.0, %v1421
        %v1423 = vpop.f32.mrf.mxu0
        %v1424 = vpop.f32.mrf.mxu0
        %v1425 = vadd.f32 0.0, %v1424
        %v1426 = vpop.f32.mrf.mxu0
        %1427 = vmatprep.mubr.bf16.mxu0 %v1382
        %1428 = vmatmul.mubr.bf16.gmra.mxu0 %v1381
        %v1429 = vpop.f32.mrf.mxu0
        %v1430 = vadd.f32 0.0, %v1429
        %v1431 = vpop.f32.mrf.mxu0
        %v1432 = vpop.f32.mrf.mxu0
        %v1433 = vadd.f32 0.0, %v1432
        %v1434 = vpop.f32.mrf.mxu0
        %1435 = vdwg.mxu0
        %s1436 = sld [smem:[#allocation5]]
        %s1437 = sshra.s32 %s748, 7
        %s1438 = sand.u32 %s748, 127
        %s1439 = smul.addr %s1437, 8
        %s1440 = scalar_lea.vmem %s206, %s1439 [#allocation6]
        %v1441 = vld [vmem:[%s1440] sm:$0xff]
        %v1442 = vld [vmem:[%s1440 + $0x10] sm:$0xff]
        %v1443 = vld [vmem:[%s1440 + $0x20] sm:$0xff]
        %v1444 = vld [vmem:[%s1440 + $0x30] sm:$0xff]
        %v1445 = vstv %s1436
        %v1446 = vmul.f32 %v1445, %v1422
        %v1447 = vmul.f32 %v1445, %v1425
        %v1448 = vmul.f32 %v1445, %v1430
        %v1449 = vmul.f32 %v1445, %v1433
        %v1450 = vadd.f32 %v1446, %v1441
        %v1451 = vadd.f32 %v1447, %v1442
        %v1452 = vadd.f32 %v1448, %v1443
        %v1453 = vadd.f32 %v1449, %v1444
        %1454 = vst [vmem:[%s230] sm:$0xff] %v1450
        %1455 = vst [vmem:[%s230 + $0x8] sm:$0xff] %v1451
        %1456 = vst [vmem:[%s230 + $0x10] sm:$0xff] %v1452
        %1457 = vst [vmem:[%s230 + $0x18] sm:$0xff] %v1453
        %s1458 = sand.u32 %s133, 1
        %s1459 = scalar_lea.sflag [#allocation8], %s1458
        %s1460 = sand.u32 %s133, 1
        %s1461 = smul.addr %s1460, 32
        %s1462 = scalar_lea.vmem [#allocation9], %s1461
        // Predicated region
        $region45: #{tpu_custom_call.1} parent=35 // pred_check
          %p1463 = pneg %p143
        $region46: #{tpu_custom_call.1} parent=35 // pred_check_branch
          %1465 = sbr.rel (%p1463) target = $region48
        $region47: #{tpu_custom_call.1} parent=35 // pred_region
          %s1467 = ssub.s32 512, 512
          %1468 = vsyncadd %s1459, %s1467
          %s1469 = smul.addr %s26, 8
          %s1470 = sadd.s32 %s27, %s1469
          %s1471 = smul.addr %s1470, 128
          %s1472 = scalar_lea.hbm %s4, %s1471
          %s1473 = sshll.u32 %s1462, 4
          %s1474 = int_to_ptr.vmem [resolvable:$true] %s1473
          %1479 = dma.vmem_to_hbm [thread:$0]  %s1474, 512, %s1472, %s1459, 128, 256, 8
        $region48: #{tpu_custom_call.1} parent=35 // pred_fallthru
          _
      $region36: #{tpu_custom_call.1} parent=5 // pred_fallthru
        _
      %p1480 = scmp.le.s32.totalorder 2, %s17
      // Predicated region
      $region49: #{tpu_custom_call.1} parent=5 // pred_check
        %p1481 = pneg %p1480
      $region50: #{tpu_custom_call.1} parent=5 // pred_check_branch
        %1483 = sbr.rel (%p1481) target = $region52
      $region51: #{tpu_custom_call.1} parent=5 // pred_region
        %s1484 = ssub.s32 %s17, 2
        // Predicated region
        $region53: #{tpu_custom_call.1} parent=51 // pred_check
          %p1485 = pneg %p149
        $region54: #{tpu_custom_call.1} parent=51 // pred_check_branch
          %1487 = sbr.rel (%p1485) target = $region56
        $region55: #{tpu_custom_call.1} parent=51 // pred_region
          %s1488 = sand.u32 %s134, 1
          %s1489 = scalar_lea.sflag [#allocation8], %s1488
          %s1490 = sand.u32 %s134, 1
          %s1491 = smul.addr %s1490, 32
          %s1492 = scalar_lea.vmem [#allocation9], %s1491
          %1493 = dma.done %s1489, 512
        $region56: #{tpu_custom_call.1} parent=51 // pred_fallthru
          _
      $region52: #{tpu_custom_call.1} parent=5 // pred_fallthru
        _
    $region6: #{tpu_custom_call.1} parent=1 // loop_footer
      %s21 = sadd.s32 1, %s17
    $region7: #{tpu_custom_call.1} parent=1 // loop_footer_branch
      %16 = sbr.rel target = $region3
    $region8: #{tpu_custom_call.1} parent=1 // loop_exit
      _
    %1494 = vsyncpa [#allocation7], 1
    %s1495 = scalar_lea.sflag [#allocation7], 1
    %1496 = vsyncpa %s1495, 1
    %1497 = vsyncpa [#allocation8], 1
    %s1498 = scalar_lea.sflag [#allocation8], 1
    %1499 = vsyncpa %s1498, 1

</llo_original>
